<compile_context>
chip_gen: v6e
topology: v6e:2x2x1
jax: 0.10.0
libtpu: 0.0.40
codegen_flags: <defaults>
</compile_context>

<pallas_src>
import jax
import jax.numpy as jnp
from jax.experimental import pallas as pl
from jax.experimental.pallas import tpu as pltpu


def _mlp_kernel(x_ref, w1_ref, b1_ref, wh_ref, bh_ref, wl_ref, bl_ref, o_ref):
    """Whole MLP forward for one batch tile (batch on lanes), entirely in VMEM.

    x_ref:  [in_dim, tile_n]        w1_ref: [h, in_dim]   b1_ref: [h, 1]
    wh_ref: [n_hidden, h, h]        bh_ref: [n_hidden, h, 1]
    wl_ref: [out_dim, h]            bl_ref: [out_dim, 1]
    o_ref:  [out_dim, tile_n]
    """
    in_dim = x_ref.shape[0]
    n_hidden = wh_ref.shape[0]

    x = x_ref[...]                      # [in_dim, tile_n]
    w1 = w1_ref[...]                    # [h, in_dim]

    # ---- H1 on the VPU: K == in_dim (2) is far too small to feed the MXU ----
    acc = b1_ref[...]                   # [h, 1] -> broadcasts over lanes (batch)
    for k in range(in_dim):
        acc = acc + w1[:, k:k + 1] * x[k:k + 1, :]
    h = jnp.tanh(acc)                   # [h, tile_n]

    # ---- square hidden layers on the MXU (batch is lane-dense N dim) ----
    # TODO(synk): on v6e/v7x a bf16 tanh path (~2x EUP) is possible; kept f32
    # so one kernel serves v5e as well.
    for i in range(n_hidden):
        h = jnp.tanh(
            jnp.dot(wh_ref[i], h, preferred_element_type=jnp.float32) + bh_ref[i]
        )

    out = jnp.dot(wl_ref[...], h, preferred_element_type=jnp.float32) + bl_ref[...]
    o_ref[...] = out.astype(o_ref.dtype)


def _full_block(arr):
    """Whole-array block, resident in VMEM across all grid steps."""
    nd = arr.ndim
    return pl.BlockSpec(arr.shape, lambda i, _nd=nd: (0,) * _nd)


def mlp_forward(x, params, *, tile_n=512):
    """x: [N, input_dim]; params: [(w, b), ...] in PyTorch nn.Linear layout
    (w: [out, in], b: [out]), ordered [H1, hidden..., last]."""
    assert tile_n % 128 == 0, "tile_n must be a multiple of 128 (lane width)"
    N, in_dim = x.shape

    w1, b1 = params[0]
    hidden = params[1:-1]
    wl, bl = params[-1]

    h_dim = w1.shape[0]
    out_dim = wl.shape[0]
    assert all(w.shape == (h_dim, h_dim) for w, _ in hidden), (
        "packed hidden weights require equal square hidden widths")

    # Pack params: 6 operands instead of 12 tiny ones.
    wh = jnp.stack([w for w, _ in hidden])              # [n_hidden, h, h]
    bh = jnp.stack([b for _, b in hidden])[:, :, None]  # [n_hidden, h, 1]
    b1_2d = b1[:, None]                                 # [h, 1]
    bl_2d = bl[:, None]                                 # [out_dim, 1]

    # Batch-on-lanes layout: transpose + pad batch to a multiple of tile_n.
    n_pad = -(-N // tile_n) * tile_n
    x_t = jnp.pad(x.T, ((0, 0), (0, n_pad - N)))        # [in_dim, n_pad]

    x_spec = pl.BlockSpec((in_dim, tile_n), lambda i: (0, i))
    o_spec = pl.BlockSpec((out_dim, tile_n), lambda i: (0, i))
    param_specs = [_full_block(p) for p in (w1, b1_2d, wh, bh, wl, bl_2d)]

    out_t = pl.pallas_call(
        _mlp_kernel,
        out_shape=jax.ShapeDtypeStruct((out_dim, n_pad), x.dtype),
        grid_spec=pltpu.PrefetchScalarGridSpec(
            num_scalar_prefetch=0,
            grid=(n_pad // tile_n,),
            in_specs=[x_spec] + param_specs,
            out_specs=o_spec,
        ),
        compiler_params=pltpu.CompilerParams(
            dimension_semantics=("parallel",),
            vmem_limit_bytes=32 * 1024 * 1024,
        ),
    )(x_t, w1, b1_2d, wh, bh, wl, bl_2d)

    return out_t[:, :N].T                               # [N, out_dim]


def init_params(key, input_dim=2, output_dim=2, layers=(40, 40, 40, 40)):
    """PyTorch nn.Linear-style params: w [out, in], b [out], U(-1/sqrt(fan_in), +)."""
    def linear(k, fan_in, fan_out):
        kw, kb = jax.random.split(k)
        bound = 1.0 / (fan_in ** 0.5)
        w = jax.random.uniform(kw, (fan_out, fan_in), jnp.float32, -bound, bound)
        b = jax.random.uniform(kb, (fan_out,), jnp.float32, -bound, bound)
        return w, b

    keys = jax.random.split(key, len(layers) + 2)
    params = [linear(keys[0], input_dim, layers[0])]            # H1
    for i, width in enumerate(layers):                          # square hiddens
        params.append(linear(keys[1 + i], width, width))
    params.append(linear(keys[-1], layers[-1], output_dim))     # last (correct fan-in)
    return params


def mlp_reference(x, params):
    """Pure-JAX reference mirroring the PyTorch forward."""
    w1, b1 = params[0]
    h = jnp.tanh(x @ w1.T + b1)
    for w, b in params[1:-1]:
        h = jnp.tanh(h @ w.T + b)
    wl, bl = params[-1]
    return h @ wl.T + bl


if __name__ == "__main__":
    key = jax.random.PRNGKey(0)
    k_param, k_x = jax.random.split(key)

    input_dim, output_dim, layers = 2, 2, (40, 40, 40, 40)
    batch = 1000       # not a tile multiple -> exercises pad + crop path
    tile_n = 512       # lane-dense: 4x128 (v5e) / 2x256 (v6e, v7x); >=2 grid steps

    params = init_params(k_param, input_dim, output_dim, layers)
    x = jax.random.normal(k_x, (batch, input_dim), dtype=jnp.float32)

    out = mlp_forward(x, params, tile_n=tile_n)
    out = jax.block_until_ready(out)

    ref = mlp_reference(x, params)
    assert out.shape == (batch, output_dim)
    assert jnp.allclose(out, ref, atol=1e-4, rtol=1e-4), "Pallas output mismatch"

    print("KERNEL_OK")
</pallas_src>

<mosaic_0001>
module attributes {stable_mosaic.version = 11 : i64} {
  func.func @_mlp_kernel(%arg0: i32, %arg1: memref<2x512xf32, #tpu.memory_space<vmem>>, %arg2: memref<40x2xf32, #tpu.memory_space<vmem>>, %arg3: memref<40x1xf32, #tpu.memory_space<vmem>>, %arg4: memref<4x40x40xf32, #tpu.memory_space<vmem>>, %arg5: memref<4x40x1xf32, #tpu.memory_space<vmem>>, %arg6: memref<2x40xf32, #tpu.memory_space<vmem>>, %arg7: memref<2x1xf32, #tpu.memory_space<vmem>>, %arg8: memref<2x512xf32, #tpu.memory_space<vmem>>) attributes {dimension_semantics = [#tpu.dimension_semantics<parallel>], iteration_bounds = array<i64: 2>, scalar_prefetch = 0 : i64, scratch_operands = 0 : i64, tpu.core_type = #tpu.core_type<tc>, window_params = [{transform_indices = @transform_0, window_bounds = array<i64: 2, 512>}, {pipeline_mode = #tpu.pipeline_mode<synchronous>, transform_indices = @transform_1, window_bounds = array<i64: 40, 2>}, {pipeline_mode = #tpu.pipeline_mode<synchronous>, transform_indices = @transform_2, window_bounds = array<i64: 40, 1>}, {pipeline_mode = #tpu.pipeline_mode<synchronous>, transform_indices = @transform_3, window_bounds = array<i64: 4, 40, 40>}, {pipeline_mode = #tpu.pipeline_mode<synchronous>, transform_indices = @transform_4, window_bounds = array<i64: 4, 40, 1>}, {pipeline_mode = #tpu.pipeline_mode<synchronous>, transform_indices = @transform_5, window_bounds = array<i64: 2, 40>}, {pipeline_mode = #tpu.pipeline_mode<synchronous>, transform_indices = @transform_6, window_bounds = array<i64: 2, 1>}, {transform_indices = @transform_7, window_bounds = array<i64: 2, 512>}]} {
    %c0 = arith.constant 0 : index
    %c0_0 = arith.constant 0 : index
    %0 = vector.load %arg1[%c0, %c0_0] : memref<2x512xf32, #tpu.memory_space<vmem>>, vector<2x512xf32>
    %c0_1 = arith.constant 0 : index
    %c0_2 = arith.constant 0 : index
    %1 = vector.load %arg2[%c0_1, %c0_2] : memref<40x2xf32, #tpu.memory_space<vmem>>, vector<40x2xf32>
    %c0_3 = arith.constant 0 : index
    %c0_4 = arith.constant 0 : index
    %2 = vector.load %arg3[%c0_3, %c0_4] : memref<40x1xf32, #tpu.memory_space<vmem>>, vector<40x1xf32>
    %3 = vector.extract_strided_slice %1 {offsets = [0, 0], sizes = [40, 1], strides = [1, 1]} : vector<40x2xf32> to vector<40x1xf32>
    %4 = vector.extract_strided_slice %0 {offsets = [0, 0], sizes = [1, 512], strides = [1, 1]} : vector<2x512xf32> to vector<1x512xf32>
    %5 = vector.broadcast %3 : vector<40x1xf32> to vector<40x512xf32>
    %6 = vector.broadcast %4 : vector<1x512xf32> to vector<40x512xf32>
    %7 = arith.mulf %5, %6 : vector<40x512xf32>
    %8 = vector.broadcast %2 : vector<40x1xf32> to vector<40x512xf32>
    %9 = arith.addf %8, %7 : vector<40x512xf32>
    %10 = vector.extract_strided_slice %1 {offsets = [0, 1], sizes = [40, 1], strides = [1, 1]} : vector<40x2xf32> to vector<40x1xf32>
    %11 = vector.extract_strided_slice %0 {offsets = [1, 0], sizes = [1, 512], strides = [1, 1]} : vector<2x512xf32> to vector<1x512xf32>
    %12 = vector.broadcast %10 : vector<40x1xf32> to vector<40x512xf32>
    %13 = vector.broadcast %11 : vector<1x512xf32> to vector<40x512xf32>
    %14 = arith.mulf %12, %13 : vector<40x512xf32>
    %15 = arith.addf %9, %14 : vector<40x512xf32>
    %16 = math.tanh %15 : vector<40x512xf32>
    %c0_5 = arith.constant 0 : index
    %c0_6 = arith.constant 0 : index
    %c0_7 = arith.constant 0 : index
    %17 = vector.load %arg4[%c0_5, %c0_6, %c0_7] : memref<4x40x40xf32, #tpu.memory_space<vmem>>, vector<1x40x40xf32>
    %18 = vector.shape_cast %17 : vector<1x40x40xf32> to vector<40x40xf32>
    %cst = arith.constant dense<0.000000e+00> : vector<40x512xf32>
    %19 = tpu.matmul %18, %16, %cst {dimension_numbers = #tpu.dot_dimension_numbers<[1], [0], [0], [1], [0, 0, 1, 1], [], []>} : vector<40x40xf32>, vector<40x512xf32>, vector<40x512xf32> -> vector<40x512xf32>
    %c0_8 = arith.constant 0 : index
    %c0_9 = arith.constant 0 : index
    %c0_10 = arith.constant 0 : index
    %20 = vector.load %arg5[%c0_8, %c0_9, %c0_10] : memref<4x40x1xf32, #tpu.memory_space<vmem>>, vector<1x40x1xf32>
    %21 = vector.shape_cast %20 : vector<1x40x1xf32> to vector<40x1xf32>
    %22 = vector.broadcast %21 : vector<40x1xf32> to vector<40x512xf32>
    %23 = arith.addf %19, %22 : vector<40x512xf32>
    %24 = math.tanh %23 : vector<40x512xf32>
    %c1 = arith.constant 1 : index
    %c0_11 = arith.constant 0 : index
    %c0_12 = arith.constant 0 : index
    %25 = vector.load %arg4[%c1, %c0_11, %c0_12] : memref<4x40x40xf32, #tpu.memory_space<vmem>>, vector<1x40x40xf32>
    %26 = vector.shape_cast %25 : vector<1x40x40xf32> to vector<40x40xf32>
    %cst_13 = arith.constant dense<0.000000e+00> : vector<40x512xf32>
    %27 = tpu.matmul %26, %24, %cst_13 {dimension_numbers = #tpu.dot_dimension_numbers<[1], [0], [0], [1], [0, 0, 1, 1], [], []>} : vector<40x40xf32>, vector<40x512xf32>, vector<40x512xf32> -> vector<40x512xf32>
    %c1_14 = arith.constant 1 : index
    %c0_15 = arith.constant 0 : index
    %c0_16 = arith.constant 0 : index
    %28 = vector.load %arg5[%c1_14, %c0_15, %c0_16] : memref<4x40x1xf32, #tpu.memory_space<vmem>>, vector<1x40x1xf32>
    %29 = vector.shape_cast %28 : vector<1x40x1xf32> to vector<40x1xf32>
    %30 = vector.broadcast %29 : vector<40x1xf32> to vector<40x512xf32>
    %31 = arith.addf %27, %30 : vector<40x512xf32>
    %32 = math.tanh %31 : vector<40x512xf32>
    %c2 = arith.constant 2 : index
    %c0_17 = arith.constant 0 : index
    %c0_18 = arith.constant 0 : index
    %33 = vector.load %arg4[%c2, %c0_17, %c0_18] : memref<4x40x40xf32, #tpu.memory_space<vmem>>, vector<1x40x40xf32>
    %34 = vector.shape_cast %33 : vector<1x40x40xf32> to vector<40x40xf32>
    %cst_19 = arith.constant dense<0.000000e+00> : vector<40x512xf32>
    %35 = tpu.matmul %34, %32, %cst_19 {dimension_numbers = #tpu.dot_dimension_numbers<[1], [0], [0], [1], [0, 0, 1, 1], [], []>} : vector<40x40xf32>, vector<40x512xf32>, vector<40x512xf32> -> vector<40x512xf32>
    %c2_20 = arith.constant 2 : index
    %c0_21 = arith.constant 0 : index
    %c0_22 = arith.constant 0 : index
    %36 = vector.load %arg5[%c2_20, %c0_21, %c0_22] : memref<4x40x1xf32, #tpu.memory_space<vmem>>, vector<1x40x1xf32>
    %37 = vector.shape_cast %36 : vector<1x40x1xf32> to vector<40x1xf32>
    %38 = vector.broadcast %37 : vector<40x1xf32> to vector<40x512xf32>
    %39 = arith.addf %35, %38 : vector<40x512xf32>
    %40 = math.tanh %39 : vector<40x512xf32>
    %c3 = arith.constant 3 : index
    %c0_23 = arith.constant 0 : index
    %c0_24 = arith.constant 0 : index
    %41 = vector.load %arg4[%c3, %c0_23, %c0_24] : memref<4x40x40xf32, #tpu.memory_space<vmem>>, vector<1x40x40xf32>
    %42 = vector.shape_cast %41 : vector<1x40x40xf32> to vector<40x40xf32>
    %cst_25 = arith.constant dense<0.000000e+00> : vector<40x512xf32>
    %43 = tpu.matmul %42, %40, %cst_25 {dimension_numbers = #tpu.dot_dimension_numbers<[1], [0], [0], [1], [0, 0, 1, 1], [], []>} : vector<40x40xf32>, vector<40x512xf32>, vector<40x512xf32> -> vector<40x512xf32>
    %c3_26 = arith.constant 3 : index
    %c0_27 = arith.constant 0 : index
    %c0_28 = arith.constant 0 : index
    %44 = vector.load %arg5[%c3_26, %c0_27, %c0_28] : memref<4x40x1xf32, #tpu.memory_space<vmem>>, vector<1x40x1xf32>
    %45 = vector.shape_cast %44 : vector<1x40x1xf32> to vector<40x1xf32>
    %46 = vector.broadcast %45 : vector<40x1xf32> to vector<40x512xf32>
    %47 = arith.addf %43, %46 : vector<40x512xf32>
    %48 = math.tanh %47 : vector<40x512xf32>
    %c0_29 = arith.constant 0 : index
    %c0_30 = arith.constant 0 : index
    %49 = vector.load %arg6[%c0_29, %c0_30] : memref<2x40xf32, #tpu.memory_space<vmem>>, vector<2x40xf32>
    %cst_31 = arith.constant dense<0.000000e+00> : vector<2x512xf32>
    %50 = tpu.matmul %49, %48, %cst_31 {dimension_numbers = #tpu.dot_dimension_numbers<[1], [0], [0], [1], [0, 0, 1, 1], [], []>} : vector<2x40xf32>, vector<40x512xf32>, vector<2x512xf32> -> vector<2x512xf32>
    %c0_32 = arith.constant 0 : index
    %c0_33 = arith.constant 0 : index
    %51 = vector.load %arg7[%c0_32, %c0_33] : memref<2x1xf32, #tpu.memory_space<vmem>>, vector<2x1xf32>
    %52 = vector.broadcast %51 : vector<2x1xf32> to vector<2x512xf32>
    %53 = arith.addf %50, %52 : vector<2x512xf32>
    %c0_34 = arith.constant 0 : index
    %c0_35 = arith.constant 0 : index
    %54 = vector.load %arg8[%c0_34, %c0_35] : memref<2x512xf32, #tpu.memory_space<vmem>>, vector<2x512xf32>
    tpu.vector_store %arg8[%c0_34, %c0_35], %53 {strides = array<i32>} : memref<2x512xf32, #tpu.memory_space<vmem>>, vector<2x512xf32>,
    return
  }
  func.func @transform_0(%arg0: i32) -> (i32, i32) {
    %c0_i32 = arith.constant 0 : i32
    %c0_i32_0 = arith.constant 0 : i32
    return %c0_i32, %arg0 : i32, i32
  }
  func.func @transform_1(%arg0: i32) -> (i32, i32) {
    %c0_i32 = arith.constant 0 : i32
    %c0_i32_0 = arith.constant 0 : i32
    %c0_i32_1 = arith.constant 0 : i32
    return %c0_i32, %c0_i32_0 : i32, i32
  }
  func.func @transform_2(%arg0: i32) -> (i32, i32) {
    %c0_i32 = arith.constant 0 : i32
    %c0_i32_0 = arith.constant 0 : i32
    %c0_i32_1 = arith.constant 0 : i32
    return %c0_i32, %c0_i32_0 : i32, i32
  }
  func.func @transform_3(%arg0: i32) -> (i32, i32, i32) {
    %c0_i32 = arith.constant 0 : i32
    %c0_i32_0 = arith.constant 0 : i32
    %c0_i32_1 = arith.constant 0 : i32
    %c0_i32_2 = arith.constant 0 : i32
    return %c0_i32, %c0_i32_0, %c0_i32_1 : i32, i32, i32
  }
  func.func @transform_4(%arg0: i32) -> (i32, i32, i32) {
    %c0_i32 = arith.constant 0 : i32
    %c0_i32_0 = arith.constant 0 : i32
    %c0_i32_1 = arith.constant 0 : i32
    %c0_i32_2 = arith.constant 0 : i32
    return %c0_i32, %c0_i32_0, %c0_i32_1 : i32, i32, i32
  }
  func.func @transform_5(%arg0: i32) -> (i32, i32) {
    %c0_i32 = arith.constant 0 : i32
    %c0_i32_0 = arith.constant 0 : i32
    %c0_i32_1 = arith.constant 0 : i32
    return %c0_i32, %c0_i32_0 : i32, i32
  }
  func.func @transform_6(%arg0: i32) -> (i32, i32) {
    %c0_i32 = arith.constant 0 : i32
    %c0_i32_0 = arith.constant 0 : i32
    %c0_i32_1 = arith.constant 0 : i32
    return %c0_i32, %c0_i32_0 : i32, i32
  }
  func.func @transform_7(%arg0: i32) -> (i32, i32) {
    %c0_i32 = arith.constant 0 : i32
    %c0_i32_0 = arith.constant 0 : i32
    return %c0_i32, %arg0 : i32, i32
  }
}

</mosaic_0001>

<llo_original>
// kernel: tpu_custom_call.1
$region0: #{tpu_custom_call.1}
  #allocation0 [shape = 'u32[]', space=smem, size = 0x4, offset = 0x4, fixed_abs, tag = 'smem constant byte address 0x4 - core index']
  #allocation1 [shape = 'u32[144,128]{1,0:T(1,128)}', space=vmem, size = 0x12000, scoped, tag = 'internal scratch']
  %s0 = inlined_call_operand.vmem [shape: f32[2,1024], index: 0, kind: input, shape index: {}]
  %s1 = inlined_call_operand.vmem [shape: f32[40,2], index: 1, kind: input, shape index: {}]
  %s2 = inlined_call_operand.vmem [shape: f32[40,1], index: 2, kind: input, shape index: {}]
  %s3 = inlined_call_operand.vmem [shape: f32[4,40,40], index: 3, kind: input, shape index: {}]
  %s4 = inlined_call_operand.vmem [shape: f32[4,40,1], index: 4, kind: input, shape index: {}]
  %s5 = inlined_call_operand.vmem [shape: f32[2,40], index: 5, kind: input, shape index: {}]
  %s6 = inlined_call_operand.vmem [shape: f32[2,1], index: 6, kind: input, shape index: {}]
  %s7 = inlined_call_operand.hbm [shape: f32[2,1024], index: 7, kind: output, shape index: {}]
  %s8 = sld [smem:[#allocation0]]
  $region61: #{tpu_custom_call.1} parent=0
    _
  %s10 = ssub.s32 1, %s8
  %s11 = scalar_select 0, %s10, %s8
  $region1: #{tpu_custom_call.1} parent=0
    #allocation2 [shape = 'u8[8192]{0}', space=vmem, size = 0x2000, scoped, tag = 'output window, operand 0']
    #allocation3 [shape = 's32[2]{0}', space=sflag, size = 0x8, scoped, tag = 'scoped memory for tpu_custom_call.1']
    %12 = vsyncpa [#allocation3], 0
    %s13 = scalar_lea.sflag [#allocation3], 1
    %14 = vsyncpa %s13, 0
    loop: start=0, step=1, limit=4
    $region2: #{tpu_custom_call.1} parent=1 // loop_pre_header
      _
    $region3: #{tpu_custom_call.1} parent=1 // loop_header
      %s16 = sphi 0, %s20
      %p17 = scmp.ge.s32.totalorder %s16, 4
      %s26 = sphi 0, %s28
      %s29 = sphi 0, %s26
      %s30 = sphi 0, %s29
      %s46 = sphi 0, %s30
      %s50 = sphi 0, %s50
      %s52 = sphi 0, %s50
      %s53 = sphi 0, %s52
      %s67 = sphi 0, %s53
      %s71 = sphi 0, %s71
      %s73 = sphi 0, %s71
      %s74 = sphi 0, %s73
      %s88 = sphi 0, %s74
      %s92 = sphi 0, %s92
      %s94 = sphi 0, %s92
      %s95 = sphi 0, %s94
      %s109 = sphi 0, %s95
      %s113 = sphi 0, %s113
      %s115 = sphi 0, %s113
      %s116 = sphi 0, %s115
      %s130 = sphi 0, %s116
      %s134 = sphi 0, %s134
      %s136 = sphi 0, %s134
      %s137 = sphi 0, %s136
      %s151 = sphi 0, %s137
      %s155 = sphi 0, %s155
      %s157 = sphi 0, %s155
      %s158 = sphi 0, %s157
      %s172 = sphi 0, %s158
      %s178 = sphi 0, %s180
      %s181 = sphi 0, %s178
      %s182 = sphi 0, %s181
      %s198 = sphi 0, %s182
    $region4: #{tpu_custom_call.1} parent=1 // loop_header_branch
      %19 = sbr.rel (%p17) target = $region8
    $region5: #{tpu_custom_call.1} parent=1 // loop_body
      %s21 = ssub.s32 %s16, 1
      %s22 = ssub.s32 %s16, 2
      %s23 = sadd.s32 %s16, 1
      %s24 = ssub.s32 %s16, %s23
      %p25 = scmp.eq.s32.totalorder %s24, 0
      %s27 = sadd.s32 %s26, 1
      %s28 = scalar_select %p25, %s26, %s27
      %p31 = pneg %p25
      %p32 = scmp.eq.s32.totalorder %s16, 1
      %p33 = por %p31, %p32
      %p34 = scmp.ne.s32.totalorder %s26, %s29
      %p35 = scmp.eq.s32.totalorder %s16, 0
      %p36 = por %p34, %p35
      %p37 = scmp.ne.s32.totalorder %s26, %s29
      %p38 = scmp.eq.s32.totalorder %s21, 1
      %p39 = por %p37, %p38
      %p40 = scmp.ne.s32.totalorder %s29, %s30
      %p41 = scmp.eq.s32.totalorder %s21, 0
      %p42 = por %p40, %p41
      %p43 = scmp.ne.s32.totalorder %s29, %s30
      %p44 = scmp.eq.s32.totalorder %s22, 1
      %p45 = por %p43, %p44
      %p47 = scmp.ne.s32.totalorder %s30, %s46
      %p48 = scmp.eq.s32.totalorder %s22, 0
      %p49 = por %p47, %p48
      %s51 = sadd.s32 %s50, 1
      %p54 = scmp.eq.s32.totalorder %s16, 1
      %p55 = scmp.ne.s32.totalorder %s50, %s52
      %p56 = scmp.eq.s32.totalorder %s16, 0
      %p57 = por %p55, %p56
      %p58 = scmp.ne.s32.totalorder %s50, %s52
      %p59 = scmp.eq.s32.totalorder %s21, 1
      %p60 = por %p58, %p59
      %p61 = scmp.ne.s32.totalorder %s52, %s53
      %p62 = scmp.eq.s32.totalorder %s21, 0
      %p63 = por %p61, %p62
      %p64 = scmp.ne.s32.totalorder %s52, %s53
      %p65 = scmp.eq.s32.totalorder %s22, 1
      %p66 = por %p64, %p65
      %p68 = scmp.ne.s32.totalorder %s53, %s67
      %p69 = scmp.eq.s32.totalorder %s22, 0
      %p70 = por %p68, %p69
      %s72 = sadd.s32 %s71, 1
      %p75 = scmp.eq.s32.totalorder %s16, 1
      %p76 = scmp.ne.s32.totalorder %s71, %s73
      %p77 = scmp.eq.s32.totalorder %s16, 0
      %p78 = por %p76, %p77
      %p79 = scmp.ne.s32.totalorder %s71, %s73
      %p80 = scmp.eq.s32.totalorder %s21, 1
      %p81 = por %p79, %p80
      %p82 = scmp.ne.s32.totalorder %s73, %s74
      %p83 = scmp.eq.s32.totalorder %s21, 0
      %p84 = por %p82, %p83
      %p85 = scmp.ne.s32.totalorder %s73, %s74
      %p86 = scmp.eq.s32.totalorder %s22, 1
      %p87 = por %p85, %p86
      %p89 = scmp.ne.s32.totalorder %s74, %s88
      %p90 = scmp.eq.s32.totalorder %s22, 0
      %p91 = por %p89, %p90
      %s93 = sadd.s32 %s92, 1
      %p96 = scmp.eq.s32.totalorder %s16, 1
      %p97 = scmp.ne.s32.totalorder %s92, %s94
      %p98 = scmp.eq.s32.totalorder %s16, 0
      %p99 = por %p97, %p98
      %p100 = scmp.ne.s32.totalorder %s92, %s94
      %p101 = scmp.eq.s32.totalorder %s21, 1
      %p102 = por %p100, %p101
      %p103 = scmp.ne.s32.totalorder %s94, %s95
      %p104 = scmp.eq.s32.totalorder %s21, 0
      %p105 = por %p103, %p104
      %p106 = scmp.ne.s32.totalorder %s94, %s95
      %p107 = scmp.eq.s32.totalorder %s22, 1
      %p108 = por %p106, %p107
      %p110 = scmp.ne.s32.totalorder %s95, %s109
      %p111 = scmp.eq.s32.totalorder %s22, 0
      %p112 = por %p110, %p111
      %s114 = sadd.s32 %s113, 1
      %p117 = scmp.eq.s32.totalorder %s16, 1
      %p118 = scmp.ne.s32.totalorder %s113, %s115
      %p119 = scmp.eq.s32.totalorder %s16, 0
      %p120 = por %p118, %p119
      %p121 = scmp.ne.s32.totalorder %s113, %s115
      %p122 = scmp.eq.s32.totalorder %s21, 1
      %p123 = por %p121, %p122
      %p124 = scmp.ne.s32.totalorder %s115, %s116
      %p125 = scmp.eq.s32.totalorder %s21, 0
      %p126 = por %p124, %p125
      %p127 = scmp.ne.s32.totalorder %s115, %s116
      %p128 = scmp.eq.s32.totalorder %s22, 1
      %p129 = por %p127, %p128
      %p131 = scmp.ne.s32.totalorder %s116, %s130
      %p132 = scmp.eq.s32.totalorder %s22, 0
      %p133 = por %p131, %p132
      %s135 = sadd.s32 %s134, 1
      %p138 = scmp.eq.s32.totalorder %s16, 1
      %p139 = scmp.ne.s32.totalorder %s134, %s136
      %p140 = scmp.eq.s32.totalorder %s16, 0
      %p141 = por %p139, %p140
      %p142 = scmp.ne.s32.totalorder %s134, %s136
      %p143 = scmp.eq.s32.totalorder %s21, 1
      %p144 = por %p142, %p143
      %p145 = scmp.ne.s32.totalorder %s136, %s137
      %p146 = scmp.eq.s32.totalorder %s21, 0
      %p147 = por %p145, %p146
      %p148 = scmp.ne.s32.totalorder %s136, %s137
      %p149 = scmp.eq.s32.totalorder %s22, 1
      %p150 = por %p148, %p149
      %p152 = scmp.ne.s32.totalorder %s137, %s151
      %p153 = scmp.eq.s32.totalorder %s22, 0
      %p154 = por %p152, %p153
      %s156 = sadd.s32 %s155, 1
      %p159 = scmp.eq.s32.totalorder %s16, 1
      %p160 = scmp.ne.s32.totalorder %s155, %s157
      %p161 = scmp.eq.s32.totalorder %s16, 0
      %p162 = por %p160, %p161
      %p163 = scmp.ne.s32.totalorder %s155, %s157
      %p164 = scmp.eq.s32.totalorder %s21, 1
      %p165 = por %p163, %p164
      %p166 = scmp.ne.s32.totalorder %s157, %s158
      %p167 = scmp.eq.s32.totalorder %s21, 0
      %p168 = por %p166, %p167
      %p169 = scmp.ne.s32.totalorder %s157, %s158
      %p170 = scmp.eq.s32.totalorder %s22, 1
      %p171 = por %p169, %p170
      %p173 = scmp.ne.s32.totalorder %s158, %s172
      %p174 = scmp.eq.s32.totalorder %s22, 0
      %p175 = por %p173, %p174
      %s176 = ssub.s32 %s16, %s23
      %p177 = scmp.eq.s32.totalorder %s176, 0
      %s179 = sadd.s32 %s178, 1
      %s180 = scalar_select %p177, %s178, %s179
      %p183 = pneg %p177
      %p184 = scmp.eq.s32.totalorder %s16, 1
      %p185 = por %p183, %p184
      %p186 = scmp.ne.s32.totalorder %s178, %s181
      %p187 = scmp.eq.s32.totalorder %s16, 0
      %p188 = por %p186, %p187
      %p189 = scmp.ne.s32.totalorder %s178, %s181
      %p190 = scmp.eq.s32.totalorder %s21, 1
      %p191 = por %p189, %p190
      %p192 = scmp.ne.s32.totalorder %s181, %s182
      %p193 = scmp.eq.s32.totalorder %s21, 0
      %p194 = por %p192, %p193
      %p195 = scmp.ne.s32.totalorder %s181, %s182
      %p196 = scmp.eq.s32.totalorder %s22, 1
      %p197 = por %p195, %p196
      %p199 = scmp.ne.s32.totalorder %s182, %s198
      %p200 = scmp.eq.s32.totalorder %s22, 0
      %p201 = por %p199, %p200
      %p202 = scmp.le.s32.totalorder 1, %s16
      %p203 = scmp.lt.s32.totalorder %s16, 3
      %p204 = pnand %p202, %p203
      %p205 = pneg %p204
      // Predicated region
      $region9: #{tpu_custom_call.1} parent=5 // pred_check
        _
      $region10: #{tpu_custom_call.1} parent=5 // pred_check_branch
        %207 = sbr.rel (%p204) target = $region12
      $region11: #{tpu_custom_call.1} parent=5 // pred_region
        %s208 = ssub.s32 %s16, 1
        // Predicated region
        $region13: #{tpu_custom_call.1} parent=11 // pred_check
          %p209 = pneg %p63
        $region14: #{tpu_custom_call.1} parent=11 // pred_check_branch
          %211 = sbr.rel (%p209) target = $region16
        $region15: #{tpu_custom_call.1} parent=11 // pred_region
          _
        $region16: #{tpu_custom_call.1} parent=11 // pred_fallthru
          _
        // Predicated region
        $region17: #{tpu_custom_call.1} parent=11 // pred_check
          %p212 = pneg %p84
        $region18: #{tpu_custom_call.1} parent=11 // pred_check_branch
          %214 = sbr.rel (%p212) target = $region20
        $region19: #{tpu_custom_call.1} parent=11 // pred_region
          _
        $region20: #{tpu_custom_call.1} parent=11 // pred_fallthru
          _
        // Predicated region
        $region21: #{tpu_custom_call.1} parent=11 // pred_check
          %p215 = pneg %p105
        $region22: #{tpu_custom_call.1} parent=11 // pred_check_branch
          %217 = sbr.rel (%p215) target = $region24
        $region23: #{tpu_custom_call.1} parent=11 // pred_region
          _
        $region24: #{tpu_custom_call.1} parent=11 // pred_fallthru
          _
        // Predicated region
        $region25: #{tpu_custom_call.1} parent=11 // pred_check
          %p218 = pneg %p126
        $region26: #{tpu_custom_call.1} parent=11 // pred_check_branch
          %220 = sbr.rel (%p218) target = $region28
        $region27: #{tpu_custom_call.1} parent=11 // pred_region
          _
        $region28: #{tpu_custom_call.1} parent=11 // pred_fallthru
          _
        // Predicated region
        $region29: #{tpu_custom_call.1} parent=11 // pred_check
          %p221 = pneg %p147
        $region30: #{tpu_custom_call.1} parent=11 // pred_check_branch
          %223 = sbr.rel (%p221) target = $region32
        $region31: #{tpu_custom_call.1} parent=11 // pred_region
          _
        $region32: #{tpu_custom_call.1} parent=11 // pred_fallthru
          _
        // Predicated region
        $region33: #{tpu_custom_call.1} parent=11 // pred_check
          %p224 = pneg %p168
        $region34: #{tpu_custom_call.1} parent=11 // pred_check_branch
          %226 = sbr.rel (%p224) target = $region36
        $region35: #{tpu_custom_call.1} parent=11 // pred_region
          _
        $region36: #{tpu_custom_call.1} parent=11 // pred_fallthru
          _
      $region12: #{tpu_custom_call.1} parent=5 // pred_fallthru
        _
      %p227 = scmp.lt.s32.totalorder %s16, 2
      // Predicated region
      $region37: #{tpu_custom_call.1} parent=5 // pred_check
        %p228 = pneg %p227
      $region38: #{tpu_custom_call.1} parent=5 // pred_check_branch
        %230 = sbr.rel (%p228) target = $region40
      $region39: #{tpu_custom_call.1} parent=5 // pred_region
        // Predicated region
        $region41: #{tpu_custom_call.1} parent=39 // pred_check
          %p231 = pneg %p36
        $region42: #{tpu_custom_call.1} parent=39 // pred_check_branch
          %233 = sbr.rel (%p231) target = $region44
        $region43: #{tpu_custom_call.1} parent=39 // pred_region
          %s234 = smul.u32 4, %s16
          %p235 = scmp.lt.s32.totalorder %s234, 7
          %s236 = scalar_select %p235, %s234, 7
          %s237 = smul.addr %s236, 2
          %s238 = scalar_lea.vmem %s0, %s237
          %s239 = smul.u32 4, %s16
        $region44: #{tpu_custom_call.1} parent=39 // pred_fallthru
          _
      $region40: #{tpu_custom_call.1} parent=5 // pred_fallthru
        _
      %p240 = scmp.le.s32.totalorder 1, %s16
      %p241 = scmp.lt.s32.totalorder %s16, 3
      %p242 = pnand %p240, %p241
      %p243 = pneg %p242
      // Predicated region
      $region45: #{tpu_custom_call.1} parent=5 // pred_check
        _
      $region46: #{tpu_custom_call.1} parent=5 // pred_check_branch
        %245 = sbr.rel (%p242) target = $region48
      $region47: #{tpu_custom_call.1} parent=5 // pred_region
        %s246 = ssub.s32 %s16, 1
        %s247 = smul.u32 4, %s21
        %p248 = scmp.lt.s32.totalorder %s247, 7
        %s249 = scalar_select %p248, %s247, 7
        %s250 = smul.addr %s249, 2
        %s251 = scalar_lea.vmem %s0, %s250
        %p252 = pneg %p42
        %p253 = pneg %p39
        %p254 = pneg %p63
        %p255 = pneg %p60
        %p256 = pneg %p84
        %p257 = pneg %p81
        %p258 = pneg %p105
        %p259 = pneg %p102
        %p260 = pneg %p126
        %p261 = pneg %p123
        %p262 = pneg %p147
        %p263 = pneg %p144
        %p264 = pneg %p168
        %p265 = pneg %p165
        %p266 = pneg %p194
        %p267 = pneg %p191
        %s268 = sand.u32 %s181, 1
        %s269 = scalar_lea.sflag [#allocation3], %s268
        %s270 = sand.u32 %s181, 1
        %s271 = smul.addr %s270, 8
        %s272 = scalar_lea.vmem [#allocation2], %s271
        %s273 = smul.u32 4, %s21
        %p274 = scmp.lt.s32.totalorder %s273, 7
        %s275 = scalar_select %p274, %s273, 7
        %s276 = smul.addr %s275, 2
        %s277 = scalar_lea.vmem %s0, %s276
        %s278 = smul.u32 4, %s21
        %s279 = smul.u32 4, %s21
        %v280 = vld [vmem:[%s277] sm:$0xff]
        %v281 = vld [vmem:[%s1] sm:$0xff]
        %v282 = vld [vmem:[%s1 + $0x8] sm:$0xff]
        %v283 = vld [vmem:[%s1 + $0x10] sm:$0xff]
        %v284 = vld [vmem:[%s1 + $0x18] sm:$0xff]
        %v285 = vld [vmem:[%s1 + $0x20] sm:$0xff]
        %v286 = vld [vmem:[%s2] sm:$0xff]
        %v287 = vld [vmem:[%s2 + $0x8] sm:$0xff]
        %v288 = vld [vmem:[%s2 + $0x10] sm:$0xff]
        %v289 = vld [vmem:[%s2 + $0x18] sm:$0xff]
        %v290 = vld [vmem:[%s2 + $0x20] sm:$0xff]
        %292 = vset.pattern.permute.xlu0 0
        %293 = vperm.xlu0 %292, %v281
        %v294 = vpop.permute.xlu0 %293
        %297 = vset.pattern.permute.xlu0 0
        %298 = vperm.xlu0 %297, %v282
        %v299 = vpop.permute.xlu0 %298
        %302 = vset.pattern.permute.xlu0 0
        %303 = vperm.xlu0 %302, %v283
        %v304 = vpop.permute.xlu0 %303
        %307 = vset.pattern.permute.xlu0 0
        %308 = vperm.xlu0 %307, %v284
        %v309 = vpop.permute.xlu0 %308
        %312 = vset.pattern.permute.xlu0 0
        %313 = vperm.xlu0 %312, %v285
        %v314 = vpop.permute.xlu0 %313
        %v317 = vlaneseq
        %v318 = vshrl.u32 %v317, 7
        %v319 = vsub.s32 0, %v318
        %v320 = vrot.slane %v280, %v319
        %v321 = vlaneseq
        %v322 = vshrl.u32 %v321, 7
        %v323 = vsub.s32 2, %v322
        %v324 = vrot.slane %v280, %v323
        %v325 = vlaneseq
        %v326 = vshrl.u32 %v325, 7
        %v327 = vsub.s32 4, %v326
        %v328 = vrot.slane %v280, %v327
        %v329 = vlaneseq
        %v330 = vshrl.u32 %v329, 7
        %v331 = vsub.s32 6, %v330
        %v332 = vrot.slane %v280, %v331
        %v337 = vlaneseq
        %v338 = vshrl.u32 %v337, 7
        %v339 = vsub.s32 0, %v338
        %v340 = vrot.slane %v320, %v339
        %v341 = vlaneseq
        %v342 = vshrl.u32 %v341, 7
        %v343 = vsub.s32 0, %v342
        %v344 = vrot.slane %v324, %v343
        %v345 = vlaneseq
        %v346 = vshrl.u32 %v345, 7
        %v347 = vsub.s32 0, %v346
        %v348 = vrot.slane %v328, %v347
        %v349 = vlaneseq
        %v350 = vshrl.u32 %v349, 7
        %v351 = vsub.s32 0, %v350
        %v352 = vrot.slane %v332, %v351
        %v353 = vmul.f32 %v294, %v340
        %v354 = vmul.f32 %v294, %v344
        %v355 = vmul.f32 %v294, %v348
        %v356 = vmul.f32 %v294, %v352
        %v357 = vmul.f32 %v299, %v340
        %v358 = vmul.f32 %v299, %v344
        %v359 = vmul.f32 %v299, %v348
        %v360 = vmul.f32 %v299, %v352
        %v361 = vmul.f32 %v304, %v340
        %v362 = vmul.f32 %v304, %v344
        %v363 = vmul.f32 %v304, %v348
        %v364 = vmul.f32 %v304, %v352
        %v365 = vmul.f32 %v309, %v340
        %v366 = vmul.f32 %v309, %v344
        %v367 = vmul.f32 %v309, %v348
        %v368 = vmul.f32 %v309, %v352
        %v369 = vmul.f32 %v314, %v340
        %v370 = vmul.f32 %v314, %v344
        %v371 = vmul.f32 %v314, %v348
        %v372 = vmul.f32 %v314, %v352
        %374 = vset.pattern.permute.xlu0 0
        %375 = vperm.xlu0 %374, %v286
        %v376 = vpop.permute.xlu0 %375
        %379 = vset.pattern.permute.xlu0 0
        %380 = vperm.xlu0 %379, %v287
        %v381 = vpop.permute.xlu0 %380
        %384 = vset.pattern.permute.xlu0 0
        %385 = vperm.xlu0 %384, %v288
        %v386 = vpop.permute.xlu0 %385
        %389 = vset.pattern.permute.xlu0 0
        %390 = vperm.xlu0 %389, %v289
        %v391 = vpop.permute.xlu0 %390
        %394 = vset.pattern.permute.xlu0 0
        %395 = vperm.xlu0 %394, %v290
        %v396 = vpop.permute.xlu0 %395
        %v398 = vadd.f32 %v376, %v353
        %v399 = vadd.f32 %v376, %v354
        %v400 = vadd.f32 %v376, %v355
        %v401 = vadd.f32 %v376, %v356
        %v402 = vadd.f32 %v381, %v357
        %v403 = vadd.f32 %v381, %v358
        %v404 = vadd.f32 %v381, %v359
        %v405 = vadd.f32 %v381, %v360
        %v406 = vadd.f32 %v386, %v361
        %v407 = vadd.f32 %v386, %v362
        %v408 = vadd.f32 %v386, %v363
        %v409 = vadd.f32 %v386, %v364
        %v410 = vadd.f32 %v391, %v365
        %v411 = vadd.f32 %v391, %v366
        %v412 = vadd.f32 %v391, %v367
        %v413 = vadd.f32 %v391, %v368
        %v414 = vadd.f32 %v396, %v369
        %v415 = vadd.f32 %v396, %v370
        %v416 = vadd.f32 %v396, %v371
        %v417 = vadd.f32 %v396, %v372
        %418 = vset.pattern.permute.xlu0 1
        %419 = vperm.xlu0 %418, %v281
        %v420 = vpop.permute.xlu0 %419
        %422 = vset.pattern.permute.xlu0 1
        %423 = vperm.xlu0 %422, %v282
        %v424 = vpop.permute.xlu0 %423
        %426 = vset.pattern.permute.xlu0 1
        %427 = vperm.xlu0 %426, %v283
        %v428 = vpop.permute.xlu0 %427
        %430 = vset.pattern.permute.xlu0 1
        %431 = vperm.xlu0 %430, %v284
        %v432 = vpop.permute.xlu0 %431
        %434 = vset.pattern.permute.xlu0 1
        %435 = vperm.xlu0 %434, %v285
        %v436 = vpop.permute.xlu0 %435
        %v438 = vlaneseq
        %v439 = vshrl.u32 %v438, 7
        %v440 = vsub.s32 1, %v439
        %v441 = vrot.slane %v280, %v440
        %v442 = vlaneseq
        %v443 = vshrl.u32 %v442, 7
        %v444 = vsub.s32 3, %v443
        %v445 = vrot.slane %v280, %v444
        %v446 = vlaneseq
        %v447 = vshrl.u32 %v446, 7
        %v448 = vsub.s32 5, %v447
        %v449 = vrot.slane %v280, %v448
        %v450 = vlaneseq
        %v451 = vshrl.u32 %v450, 7
        %v452 = vsub.s32 7, %v451
        %v453 = vrot.slane %v280, %v452
        %v458 = vlaneseq
        %v459 = vshrl.u32 %v458, 7
        %v460 = vsub.s32 1, %v459
        %v461 = vrot.slane %v441, %v460
        %v462 = vlaneseq
        %v463 = vshrl.u32 %v462, 7
        %v464 = vsub.s32 1, %v463
        %v465 = vrot.slane %v445, %v464
        %v466 = vlaneseq
        %v467 = vshrl.u32 %v466, 7
        %v468 = vsub.s32 1, %v467
        %v469 = vrot.slane %v449, %v468
        %v470 = vlaneseq
        %v471 = vshrl.u32 %v470, 7
        %v472 = vsub.s32 1, %v471
        %v473 = vrot.slane %v453, %v472
        %v474 = vmul.f32 %v420, %v461
        %v475 = vmul.f32 %v420, %v465
        %v476 = vmul.f32 %v420, %v469
        %v477 = vmul.f32 %v420, %v473
        %v478 = vmul.f32 %v424, %v461
        %v479 = vmul.f32 %v424, %v465
        %v480 = vmul.f32 %v424, %v469
        %v481 = vmul.f32 %v424, %v473
        %v482 = vmul.f32 %v428, %v461
        %v483 = vmul.f32 %v428, %v465
        %v484 = vmul.f32 %v428, %v469
        %v485 = vmul.f32 %v428, %v473
        %v486 = vmul.f32 %v432, %v461
        %v487 = vmul.f32 %v432, %v465
        %v488 = vmul.f32 %v432, %v469
        %v489 = vmul.f32 %v432, %v473
        %v490 = vmul.f32 %v436, %v461
        %v491 = vmul.f32 %v436, %v465
        %v492 = vmul.f32 %v436, %v469
        %v493 = vmul.f32 %v436, %v473
        %v494 = vadd.f32 %v398, %v474
        %v495 = vadd.f32 %v399, %v475
        %v496 = vadd.f32 %v400, %v476
        %v497 = vadd.f32 %v401, %v477
        %v498 = vadd.f32 %v402, %v478
        %v499 = vadd.f32 %v403, %v479
        %v500 = vadd.f32 %v404, %v480
        %v501 = vadd.f32 %v405, %v481
        %v502 = vadd.f32 %v406, %v482
        %v503 = vadd.f32 %v407, %v483
        %v504 = vadd.f32 %v408, %v484
        %v505 = vadd.f32 %v409, %v485
        %v506 = vadd.f32 %v410, %v486
        %v507 = vadd.f32 %v411, %v487
        %v508 = vadd.f32 %v412, %v488
        %v509 = vadd.f32 %v413, %v489
        %v510 = vadd.f32 %v414, %v490
        %v511 = vadd.f32 %v415, %v491
        %v512 = vadd.f32 %v416, %v492
        %v513 = vadd.f32 %v417, %v493
        %v514 = vtanh.pop %v494
        %v515 = vtanh.pop %v495
        %v516 = vtanh.pop %v496
        %v517 = vtanh.pop %v497
        %v518 = vtanh.pop %v498
        %v519 = vtanh.pop %v499
        %v520 = vtanh.pop %v500
        %v521 = vtanh.pop %v501
        %v522 = vtanh.pop %v502
        %v523 = vtanh.pop %v503
        %v524 = vtanh.pop %v504
        %v525 = vtanh.pop %v505
        %v526 = vtanh.pop %v506
        %v527 = vtanh.pop %v507
        %v528 = vtanh.pop %v508
        %v529 = vtanh.pop %v509
        %v530 = vtanh.pop %v510
        %v531 = vtanh.pop %v511
        %v532 = vtanh.pop %v512
        %v533 = vtanh.pop %v513
        %v534 = vld [vmem:[%s3] sm:$0xff]
        %v535 = vld [vmem:[%s3 + $0x8] sm:$0xff]
        %v536 = vld [vmem:[%s3 + $0x10] sm:$0xff]
        %v537 = vld [vmem:[%s3 + $0x18] sm:$0xff]
        %v538 = vld [vmem:[%s3 + $0x20] sm:$0xff]
        %v539 = vld [vmem:[%s4] sm:$0xff]
        %v540 = vld [vmem:[%s4 + $0x8] sm:$0xff]
        %v541 = vld [vmem:[%s4 + $0x10] sm:$0xff]
        %v542 = vld [vmem:[%s4 + $0x18] sm:$0xff]
        %v543 = vld [vmem:[%s4 + $0x20] sm:$0xff]
        %545 = vset.pattern.permute.xlu0 0
        %546 = vperm.xlu0 %545, %v539
        %v547 = vpop.permute.xlu0 %546
        %550 = vset.pattern.permute.xlu0 0
        %551 = vperm.xlu0 %550, %v540
        %v552 = vpop.permute.xlu0 %551
        %555 = vset.pattern.permute.xlu0 0
        %556 = vperm.xlu0 %555, %v541
        %v557 = vpop.permute.xlu0 %556
        %560 = vset.pattern.permute.xlu0 0
        %561 = vperm.xlu0 %560, %v542
        %v562 = vpop.permute.xlu0 %561
        %565 = vset.pattern.permute.xlu0 0
        %566 = vperm.xlu0 %565, %v543
        %v567 = vpop.permute.xlu0 %566
        %vm569 = vcmask 326656
        %v571 = vsel %vm569, %v534, 0
        %v574 = vsel %vm569, %v535, 0
        %v577 = vsel %vm569, %v536, 0
        %v580 = vsel %vm569, %v537, 0
        %v583 = vsel %vm569, %v538, 0
        %585 = vmatprep.subr.mxu0 0.0
        %586 = vmatpush1.msra.mxu0 0.0
        %587 = vmatprep.subr.mxu0 0.0
        %588 = vmatpush1.msra.mxu0 0.0
        %589 = vmatprep.subr.mxu0 0.0
        %590 = vmatpush1.msra.mxu0 0.0
        %591 = vmatprep.subr.mxu0 0.0
        %592 = vmatpush1.msra.mxu0 0.0
        %593 = vmatprep.subr.mxu0 0.0
        %594 = vmatpush1.msra.mxu0 0.0
        %595 = vmatprep.subr.mxu0 0.0
        %596 = vmatpush1.msra.mxu0 0.0
        %597 = vmatprep.subr.mxu0 0.0
        %598 = vmatpush1.msra.mxu0 0.0
        %599 = vmatprep.subr.mxu0 0.0
        %600 = vmatpush1.msra.mxu0 0.0
        %601 = vmatprep.subr.mxu0 0.0
        %602 = vmatpush1.msra.mxu0 0.0
        %603 = vmatprep.subr.mxu0 0.0
        %604 = vmatpush1.msra.mxu0 0.0
        %605 = vmatprep.subr.mxu0 0.0
        %606 = vmatpush1.msra.mxu0 0.0
        %607 = vmatprep.subr.mxu0 %v531
        %608 = vmatpush1.msra.mxu0 %v530
        %609 = vmatprep.subr.mxu0 %v527
        %610 = vmatpush1.msra.mxu0 %v526
        %611 = vmatprep.subr.mxu0 %v523
        %612 = vmatpush1.msra.mxu0 %v522
        %613 = vmatprep.subr.mxu0 %v519
        %614 = vmatpush1.msra.mxu0 %v518
        %615 = vmatprep.subr.mxu0 %v515
        %616 = vmatpush1.msra.mxu0 %v514
        %617 = vmatprep.subr.mxu0 0.0
        %618 = vmatpush2.msra.mxu0 0.0
        %619 = vmatprep.subr.mxu0 0.0
        %620 = vmatpush2.msra.mxu0 0.0
        %621 = vmatprep.subr.mxu0 0.0
        %622 = vmatpush2.msra.mxu0 0.0
        %623 = vmatprep.subr.mxu0 0.0
        %624 = vmatpush2.msra.mxu0 0.0
        %625 = vmatprep.subr.mxu0 0.0
        %626 = vmatpush2.msra.mxu0 0.0
        %627 = vmatprep.subr.mxu0 0.0
        %628 = vmatpush2.msra.mxu0 0.0
        %629 = vmatprep.subr.mxu0 0.0
        %630 = vmatpush2.msra.mxu0 0.0
        %631 = vmatprep.subr.mxu0 0.0
        %632 = vmatpush2.msra.mxu0 0.0
        %633 = vmatprep.subr.mxu0 0.0
        %634 = vmatpush2.msra.mxu0 0.0
        %635 = vmatprep.subr.mxu0 0.0
        %636 = vmatpush2.msra.mxu0 0.0
        %637 = vmatprep.subr.mxu0 0.0
        %638 = vmatpush2.msra.mxu0 0.0
        %639 = vmatprep.subr.mxu0 0.0
        %640 = vmatpush2.msra.mxu0 0.0
        %641 = vmatprep.subr.mxu0 0.0
        %642 = vmatpush2.msra.mxu0 0.0
        %643 = vmatprep.subr.mxu0 0.0
        %644 = vmatpush2.msra.mxu0 0.0
        %645 = vmatprep.subr.mxu0 0.0
        %646 = vmatpush2.msra.mxu0 0.0
        %647 = vmatprep.subr.mxu0 0.0
        %648 = vmatpush2.msra.mxu0 0.0
        %649 = vmatprep.mubr.f32.mxu0 0.0
        %650 = vmatmul.mubr.f32.gmra.mxu0 %v571
        %v651 = vpop.f32.mrf.mxu0
        %v652 = vadd.f32 %v547, %v651
        %v653 = vpop.f32.mrf.mxu0
        %v654 = vadd.f32 %v547, %v653
        %655 = vmatprep.mubr.f32.mxu0 0.0
        %656 = vmatmul.mubr.f32.gmra.mxu0 %v574
        %v657 = vpop.f32.mrf.mxu0
        %v658 = vadd.f32 %v552, %v657
        %v659 = vpop.f32.mrf.mxu0
        %v660 = vadd.f32 %v552, %v659
        %661 = vmatprep.mubr.f32.mxu0 0.0
        %662 = vmatmul.mubr.f32.gmra.mxu0 %v577
        %v663 = vpop.f32.mrf.mxu0
        %v664 = vadd.f32 %v557, %v663
        %v665 = vpop.f32.mrf.mxu0
        %v666 = vadd.f32 %v557, %v665
        %667 = vmatprep.mubr.f32.mxu0 0.0
        %668 = vmatmul.mubr.f32.gmra.mxu0 %v580
        %v669 = vpop.f32.mrf.mxu0
        %v670 = vadd.f32 %v562, %v669
        %v671 = vpop.f32.mrf.mxu0
        %v672 = vadd.f32 %v562, %v671
        %673 = vmatprep.mubr.f32.mxu0 0.0
        %674 = vmatmul.mubr.f32.gmra.mxu0 %v583
        %v675 = vpop.f32.mrf.mxu0
        %v676 = vadd.f32 %v567, %v675
        %v677 = vpop.f32.mrf.mxu0
        %v678 = vadd.f32 %v567, %v677
        %679 = vdwg.mxu0
        %680 = vmatprep.subr.mxu0 0.0
        %681 = vmatpush1.msra.mxu0 0.0
        %682 = vmatprep.subr.mxu0 0.0
        %683 = vmatpush1.msra.mxu0 0.0
        %684 = vmatprep.subr.mxu0 0.0
        %685 = vmatpush1.msra.mxu0 0.0
        %686 = vmatprep.subr.mxu0 0.0
        %687 = vmatpush1.msra.mxu0 0.0
        %688 = vmatprep.subr.mxu0 0.0
        %689 = vmatpush1.msra.mxu0 0.0
        %690 = vmatprep.subr.mxu0 0.0
        %691 = vmatpush1.msra.mxu0 0.0
        %692 = vmatprep.subr.mxu0 0.0
        %693 = vmatpush1.msra.mxu0 0.0
        %694 = vmatprep.subr.mxu0 0.0
        %695 = vmatpush1.msra.mxu0 0.0
        %696 = vmatprep.subr.mxu0 0.0
        %697 = vmatpush1.msra.mxu0 0.0
        %698 = vmatprep.subr.mxu0 0.0
        %699 = vmatpush1.msra.mxu0 0.0
        %700 = vmatprep.subr.mxu0 0.0
        %701 = vmatpush1.msra.mxu0 0.0
        %702 = vmatprep.subr.mxu0 %v533
        %703 = vmatpush1.msra.mxu0 %v532
        %704 = vmatprep.subr.mxu0 %v529
        %705 = vmatpush1.msra.mxu0 %v528
        %706 = vmatprep.subr.mxu0 %v525
        %707 = vmatpush1.msra.mxu0 %v524
        %708 = vmatprep.subr.mxu0 %v521
        %709 = vmatpush1.msra.mxu0 %v520
        %710 = vmatprep.subr.mxu0 %v517
        %711 = vmatpush1.msra.mxu0 %v516
        %712 = vmatprep.subr.mxu0 0.0
        %713 = vmatpush2.msra.mxu0 0.0
        %714 = vmatprep.subr.mxu0 0.0
        %715 = vmatpush2.msra.mxu0 0.0
        %716 = vmatprep.subr.mxu0 0.0
        %717 = vmatpush2.msra.mxu0 0.0
        %718 = vmatprep.subr.mxu0 0.0
        %719 = vmatpush2.msra.mxu0 0.0
        %720 = vmatprep.subr.mxu0 0.0
        %721 = vmatpush2.msra.mxu0 0.0
        %722 = vmatprep.subr.mxu0 0.0
        %723 = vmatpush2.msra.mxu0 0.0
        %724 = vmatprep.subr.mxu0 0.0
        %725 = vmatpush2.msra.mxu0 0.0
        %726 = vmatprep.subr.mxu0 0.0
        %727 = vmatpush2.msra.mxu0 0.0
        %728 = vmatprep.subr.mxu0 0.0
        %729 = vmatpush2.msra.mxu0 0.0
        %730 = vmatprep.subr.mxu0 0.0
        %731 = vmatpush2.msra.mxu0 0.0
        %732 = vmatprep.subr.mxu0 0.0
        %733 = vmatpush2.msra.mxu0 0.0
        %734 = vmatprep.subr.mxu0 0.0
        %735 = vmatpush2.msra.mxu0 0.0
        %736 = vmatprep.subr.mxu0 0.0
        %737 = vmatpush2.msra.mxu0 0.0
        %738 = vmatprep.subr.mxu0 0.0
        %739 = vmatpush2.msra.mxu0 0.0
        %740 = vmatprep.subr.mxu0 0.0
        %741 = vmatpush2.msra.mxu0 0.0
        %742 = vmatprep.subr.mxu0 0.0
        %743 = vmatpush2.msra.mxu0 0.0
        %744 = vmatprep.mubr.f32.mxu0 0.0
        %745 = vmatmul.mubr.f32.gmra.mxu0 %v571
        %v746 = vpop.f32.mrf.mxu0
        %v747 = vadd.f32 %v547, %v746
        %v748 = vpop.f32.mrf.mxu0
        %v749 = vadd.f32 %v547, %v748
        %750 = vmatprep.mubr.f32.mxu0 0.0
        %751 = vmatmul.mubr.f32.gmra.mxu0 %v574
        %v752 = vpop.f32.mrf.mxu0
        %v753 = vadd.f32 %v552, %v752
        %v754 = vpop.f32.mrf.mxu0
        %v755 = vadd.f32 %v552, %v754
        %756 = vmatprep.mubr.f32.mxu0 0.0
        %757 = vmatmul.mubr.f32.gmra.mxu0 %v577
        %v758 = vpop.f32.mrf.mxu0
        %v759 = vadd.f32 %v557, %v758
        %v760 = vpop.f32.mrf.mxu0
        %v761 = vadd.f32 %v557, %v760
        %762 = vmatprep.mubr.f32.mxu0 0.0
        %763 = vmatmul.mubr.f32.gmra.mxu0 %v580
        %v764 = vpop.f32.mrf.mxu0
        %v765 = vadd.f32 %v562, %v764
        %v766 = vpop.f32.mrf.mxu0
        %v767 = vadd.f32 %v562, %v766
        %768 = vmatprep.mubr.f32.mxu0 0.0
        %769 = vmatmul.mubr.f32.gmra.mxu0 %v583
        %v770 = vpop.f32.mrf.mxu0
        %v771 = vadd.f32 %v567, %v770
        %v772 = vpop.f32.mrf.mxu0
        %v773 = vadd.f32 %v567, %v772
        %774 = vdwg.mxu0
        %v775 = vtanh.pop %v652
        %v776 = vtanh.pop %v654
        %v777 = vtanh.pop %v747
        %v778 = vtanh.pop %v749
        %v779 = vtanh.pop %v658
        %v780 = vtanh.pop %v660
        %v781 = vtanh.pop %v753
        %v782 = vtanh.pop %v755
        %v783 = vtanh.pop %v664
        %v784 = vtanh.pop %v666
        %v785 = vtanh.pop %v759
        %v786 = vtanh.pop %v761
        %v787 = vtanh.pop %v670
        %v788 = vtanh.pop %v672
        %v789 = vtanh.pop %v765
        %v790 = vtanh.pop %v767
        %v791 = vtanh.pop %v676
        %v792 = vtanh.pop %v678
        %v793 = vtanh.pop %v771
        %v794 = vtanh.pop %v773
        %s795 = scalar_lea.vmem %s3, 40
        %v796 = vld [vmem:[%s795] sm:$0xff]
        %v797 = vld [vmem:[%s795 + $0x8] sm:$0xff]
        %v798 = vld [vmem:[%s795 + $0x10] sm:$0xff]
        %v799 = vld [vmem:[%s795 + $0x18] sm:$0xff]
        %v800 = vld [vmem:[%s795 + $0x20] sm:$0xff]
        %s801 = scalar_lea.vmem %s4, 40
        %v802 = vld [vmem:[%s801] sm:$0xff]
        %v803 = vld [vmem:[%s801 + $0x8] sm:$0xff]
        %v804 = vld [vmem:[%s801 + $0x10] sm:$0xff]
        %v805 = vld [vmem:[%s801 + $0x18] sm:$0xff]
        %v806 = vld [vmem:[%s801 + $0x20] sm:$0xff]
        %808 = vset.pattern.permute.xlu0 0
        %809 = vperm.xlu0 %808, %v802
        %v810 = vpop.permute.xlu0 %809
        %813 = vset.pattern.permute.xlu0 0
        %814 = vperm.xlu0 %813, %v803
        %v815 = vpop.permute.xlu0 %814
        %818 = vset.pattern.permute.xlu0 0
        %819 = vperm.xlu0 %818, %v804
        %v820 = vpop.permute.xlu0 %819
        %823 = vset.pattern.permute.xlu0 0
        %824 = vperm.xlu0 %823, %v805
        %v825 = vpop.permute.xlu0 %824
        %828 = vset.pattern.permute.xlu0 0
        %829 = vperm.xlu0 %828, %v806
        %v830 = vpop.permute.xlu0 %829
        %v833 = vsel %vm569, %v796, 0
        %v836 = vsel %vm569, %v797, 0
        %v839 = vsel %vm569, %v798, 0
        %v842 = vsel %vm569, %v799, 0
        %v845 = vsel %vm569, %v800, 0
        %847 = vmatprep.subr.mxu0 0.0
        %848 = vmatpush1.msra.mxu0 0.0
        %849 = vmatprep.subr.mxu0 0.0
        %850 = vmatpush1.msra.mxu0 0.0
        %851 = vmatprep.subr.mxu0 0.0
        %852 = vmatpush1.msra.mxu0 0.0
        %853 = vmatprep.subr.mxu0 0.0
        %854 = vmatpush1.msra.mxu0 0.0
        %855 = vmatprep.subr.mxu0 0.0
        %856 = vmatpush1.msra.mxu0 0.0
        %857 = vmatprep.subr.mxu0 0.0
        %858 = vmatpush1.msra.mxu0 0.0
        %859 = vmatprep.subr.mxu0 0.0
        %860 = vmatpush1.msra.mxu0 0.0
        %861 = vmatprep.subr.mxu0 0.0
        %862 = vmatpush1.msra.mxu0 0.0
        %863 = vmatprep.subr.mxu0 0.0
        %864 = vmatpush1.msra.mxu0 0.0
        %865 = vmatprep.subr.mxu0 0.0
        %866 = vmatpush1.msra.mxu0 0.0
        %867 = vmatprep.subr.mxu0 0.0
        %868 = vmatpush1.msra.mxu0 0.0
        %869 = vmatprep.subr.mxu0 %v792
        %870 = vmatpush1.msra.mxu0 %v791
        %871 = vmatprep.subr.mxu0 %v788
        %872 = vmatpush1.msra.mxu0 %v787
        %873 = vmatprep.subr.mxu0 %v784
        %874 = vmatpush1.msra.mxu0 %v783
        %875 = vmatprep.subr.mxu0 %v780
        %876 = vmatpush1.msra.mxu0 %v779
        %877 = vmatprep.subr.mxu0 %v776
        %878 = vmatpush1.msra.mxu0 %v775
        %879 = vmatprep.subr.mxu0 0.0
        %880 = vmatpush2.msra.mxu0 0.0
        %881 = vmatprep.subr.mxu0 0.0
        %882 = vmatpush2.msra.mxu0 0.0
        %883 = vmatprep.subr.mxu0 0.0
        %884 = vmatpush2.msra.mxu0 0.0
        %885 = vmatprep.subr.mxu0 0.0
        %886 = vmatpush2.msra.mxu0 0.0
        %887 = vmatprep.subr.mxu0 0.0
        %888 = vmatpush2.msra.mxu0 0.0
        %889 = vmatprep.subr.mxu0 0.0
        %890 = vmatpush2.msra.mxu0 0.0
        %891 = vmatprep.subr.mxu0 0.0
        %892 = vmatpush2.msra.mxu0 0.0
        %893 = vmatprep.subr.mxu0 0.0
        %894 = vmatpush2.msra.mxu0 0.0
        %895 = vmatprep.subr.mxu0 0.0
        %896 = vmatpush2.msra.mxu0 0.0
        %897 = vmatprep.subr.mxu0 0.0
        %898 = vmatpush2.msra.mxu0 0.0
        %899 = vmatprep.subr.mxu0 0.0
        %900 = vmatpush2.msra.mxu0 0.0
        %901 = vmatprep.subr.mxu0 0.0
        %902 = vmatpush2.msra.mxu0 0.0
        %903 = vmatprep.subr.mxu0 0.0
        %904 = vmatpush2.msra.mxu0 0.0
        %905 = vmatprep.subr.mxu0 0.0
        %906 = vmatpush2.msra.mxu0 0.0
        %907 = vmatprep.subr.mxu0 0.0
        %908 = vmatpush2.msra.mxu0 0.0
        %909 = vmatprep.subr.mxu0 0.0
        %910 = vmatpush2.msra.mxu0 0.0
        %911 = vmatprep.mubr.f32.mxu0 0.0
        %912 = vmatmul.mubr.f32.gmra.mxu0 %v833
        %v913 = vpop.f32.mrf.mxu0
        %v914 = vadd.f32 %v810, %v913
        %v915 = vpop.f32.mrf.mxu0
        %v916 = vadd.f32 %v810, %v915
        %917 = vmatprep.mubr.f32.mxu0 0.0
        %918 = vmatmul.mubr.f32.gmra.mxu0 %v836
        %v919 = vpop.f32.mrf.mxu0
        %v920 = vadd.f32 %v815, %v919
        %v921 = vpop.f32.mrf.mxu0
        %v922 = vadd.f32 %v815, %v921
        %923 = vmatprep.mubr.f32.mxu0 0.0
        %924 = vmatmul.mubr.f32.gmra.mxu0 %v839
        %v925 = vpop.f32.mrf.mxu0
        %v926 = vadd.f32 %v820, %v925
        %v927 = vpop.f32.mrf.mxu0
        %v928 = vadd.f32 %v820, %v927
        %929 = vmatprep.mubr.f32.mxu0 0.0
        %930 = vmatmul.mubr.f32.gmra.mxu0 %v842
        %v931 = vpop.f32.mrf.mxu0
        %v932 = vadd.f32 %v825, %v931
        %v933 = vpop.f32.mrf.mxu0
        %v934 = vadd.f32 %v825, %v933
        %935 = vmatprep.mubr.f32.mxu0 0.0
        %936 = vmatmul.mubr.f32.gmra.mxu0 %v845
        %v937 = vpop.f32.mrf.mxu0
        %v938 = vadd.f32 %v830, %v937
        %v939 = vpop.f32.mrf.mxu0
        %v940 = vadd.f32 %v830, %v939
        %941 = vdwg.mxu0
        %942 = vmatprep.subr.mxu0 0.0
        %943 = vmatpush1.msra.mxu0 0.0
        %944 = vmatprep.subr.mxu0 0.0
        %945 = vmatpush1.msra.mxu0 0.0
        %946 = vmatprep.subr.mxu0 0.0
        %947 = vmatpush1.msra.mxu0 0.0
        %948 = vmatprep.subr.mxu0 0.0
        %949 = vmatpush1.msra.mxu0 0.0
        %950 = vmatprep.subr.mxu0 0.0
        %951 = vmatpush1.msra.mxu0 0.0
        %952 = vmatprep.subr.mxu0 0.0
        %953 = vmatpush1.msra.mxu0 0.0
        %954 = vmatprep.subr.mxu0 0.0
        %955 = vmatpush1.msra.mxu0 0.0
        %956 = vmatprep.subr.mxu0 0.0
        %957 = vmatpush1.msra.mxu0 0.0
        %958 = vmatprep.subr.mxu0 0.0
        %959 = vmatpush1.msra.mxu0 0.0
        %960 = vmatprep.subr.mxu0 0.0
        %961 = vmatpush1.msra.mxu0 0.0
        %962 = vmatprep.subr.mxu0 0.0
        %963 = vmatpush1.msra.mxu0 0.0
        %964 = vmatprep.subr.mxu0 %v794
        %965 = vmatpush1.msra.mxu0 %v793
        %966 = vmatprep.subr.mxu0 %v790
        %967 = vmatpush1.msra.mxu0 %v789
        %968 = vmatprep.subr.mxu0 %v786
        %969 = vmatpush1.msra.mxu0 %v785
        %970 = vmatprep.subr.mxu0 %v782
        %971 = vmatpush1.msra.mxu0 %v781
        %972 = vmatprep.subr.mxu0 %v778
        %973 = vmatpush1.msra.mxu0 %v777
        %974 = vmatprep.subr.mxu0 0.0
        %975 = vmatpush2.msra.mxu0 0.0
        %976 = vmatprep.subr.mxu0 0.0
        %977 = vmatpush2.msra.mxu0 0.0
        %978 = vmatprep.subr.mxu0 0.0
        %979 = vmatpush2.msra.mxu0 0.0
        %980 = vmatprep.subr.mxu0 0.0
        %981 = vmatpush2.msra.mxu0 0.0
        %982 = vmatprep.subr.mxu0 0.0
        %983 = vmatpush2.msra.mxu0 0.0
        %984 = vmatprep.subr.mxu0 0.0
        %985 = vmatpush2.msra.mxu0 0.0
        %986 = vmatprep.subr.mxu0 0.0
        %987 = vmatpush2.msra.mxu0 0.0
        %988 = vmatprep.subr.mxu0 0.0
        %989 = vmatpush2.msra.mxu0 0.0
        %990 = vmatprep.subr.mxu0 0.0
        %991 = vmatpush2.msra.mxu0 0.0
        %992 = vmatprep.subr.mxu0 0.0
        %993 = vmatpush2.msra.mxu0 0.0
        %994 = vmatprep.subr.mxu0 0.0
        %995 = vmatpush2.msra.mxu0 0.0
        %996 = vmatprep.subr.mxu0 0.0
        %997 = vmatpush2.msra.mxu0 0.0
        %998 = vmatprep.subr.mxu0 0.0
        %999 = vmatpush2.msra.mxu0 0.0
        %1000 = vmatprep.subr.mxu0 0.0
        %1001 = vmatpush2.msra.mxu0 0.0
        %1002 = vmatprep.subr.mxu0 0.0
        %1003 = vmatpush2.msra.mxu0 0.0
        %1004 = vmatprep.subr.mxu0 0.0
        %1005 = vmatpush2.msra.mxu0 0.0
        %1006 = vmatprep.mubr.f32.mxu0 0.0
        %1007 = vmatmul.mubr.f32.gmra.mxu0 %v833
        %v1008 = vpop.f32.mrf.mxu0
        %v1009 = vadd.f32 %v810, %v1008
        %v1010 = vpop.f32.mrf.mxu0
        %v1011 = vadd.f32 %v810, %v1010
        %1012 = vmatprep.mubr.f32.mxu0 0.0
        %1013 = vmatmul.mubr.f32.gmra.mxu0 %v836
        %v1014 = vpop.f32.mrf.mxu0
        %v1015 = vadd.f32 %v815, %v1014
        %v1016 = vpop.f32.mrf.mxu0
        %v1017 = vadd.f32 %v815, %v1016
        %1018 = vmatprep.mubr.f32.mxu0 0.0
        %1019 = vmatmul.mubr.f32.gmra.mxu0 %v839
        %v1020 = vpop.f32.mrf.mxu0
        %v1021 = vadd.f32 %v820, %v1020
        %v1022 = vpop.f32.mrf.mxu0
        %v1023 = vadd.f32 %v820, %v1022
        %1024 = vmatprep.mubr.f32.mxu0 0.0
        %1025 = vmatmul.mubr.f32.gmra.mxu0 %v842
        %v1026 = vpop.f32.mrf.mxu0
        %v1027 = vadd.f32 %v825, %v1026
        %v1028 = vpop.f32.mrf.mxu0
        %v1029 = vadd.f32 %v825, %v1028
        %1030 = vmatprep.mubr.f32.mxu0 0.0
        %1031 = vmatmul.mubr.f32.gmra.mxu0 %v845
        %v1032 = vpop.f32.mrf.mxu0
        %v1033 = vadd.f32 %v830, %v1032
        %v1034 = vpop.f32.mrf.mxu0
        %v1035 = vadd.f32 %v830, %v1034
        %1036 = vdwg.mxu0
        %v1037 = vtanh.pop %v914
        %v1038 = vtanh.pop %v916
        %v1039 = vtanh.pop %v1009
        %v1040 = vtanh.pop %v1011
        %v1041 = vtanh.pop %v920
        %v1042 = vtanh.pop %v922
        %v1043 = vtanh.pop %v1015
        %v1044 = vtanh.pop %v1017
        %v1045 = vtanh.pop %v926
        %v1046 = vtanh.pop %v928
        %v1047 = vtanh.pop %v1021
        %v1048 = vtanh.pop %v1023
        %v1049 = vtanh.pop %v932
        %v1050 = vtanh.pop %v934
        %v1051 = vtanh.pop %v1027
        %v1052 = vtanh.pop %v1029
        %v1053 = vtanh.pop %v938
        %v1054 = vtanh.pop %v940
        %v1055 = vtanh.pop %v1033
        %v1056 = vtanh.pop %v1035
        %s1057 = scalar_lea.vmem %s3, 80
        %v1058 = vld [vmem:[%s1057] sm:$0xff]
        %v1059 = vld [vmem:[%s1057 + $0x8] sm:$0xff]
        %v1060 = vld [vmem:[%s1057 + $0x10] sm:$0xff]
        %v1061 = vld [vmem:[%s1057 + $0x18] sm:$0xff]
        %v1062 = vld [vmem:[%s1057 + $0x20] sm:$0xff]
        %s1063 = scalar_lea.vmem %s4, 80
        %v1064 = vld [vmem:[%s1063] sm:$0xff]
        %v1065 = vld [vmem:[%s1063 + $0x8] sm:$0xff]
        %v1066 = vld [vmem:[%s1063 + $0x10] sm:$0xff]
        %v1067 = vld [vmem:[%s1063 + $0x18] sm:$0xff]
        %v1068 = vld [vmem:[%s1063 + $0x20] sm:$0xff]
        %1070 = vset.pattern.permute.xlu0 0
        %1071 = vperm.xlu0 %1070, %v1064
        %v1072 = vpop.permute.xlu0 %1071
        %1075 = vset.pattern.permute.xlu0 0
        %1076 = vperm.xlu0 %1075, %v1065
        %v1077 = vpop.permute.xlu0 %1076
        %1080 = vset.pattern.permute.xlu0 0
        %1081 = vperm.xlu0 %1080, %v1066
        %v1082 = vpop.permute.xlu0 %1081
        %1085 = vset.pattern.permute.xlu0 0
        %1086 = vperm.xlu0 %1085, %v1067
        %v1087 = vpop.permute.xlu0 %1086
        %1090 = vset.pattern.permute.xlu0 0
        %1091 = vperm.xlu0 %1090, %v1068
        %v1092 = vpop.permute.xlu0 %1091
        %v1095 = vsel %vm569, %v1058, 0
        %v1098 = vsel %vm569, %v1059, 0
        %v1101 = vsel %vm569, %v1060, 0
        %v1104 = vsel %vm569, %v1061, 0
        %v1107 = vsel %vm569, %v1062, 0
        %1109 = vmatprep.subr.mxu0 0.0
        %1110 = vmatpush1.msra.mxu0 0.0
        %1111 = vmatprep.subr.mxu0 0.0
        %1112 = vmatpush1.msra.mxu0 0.0
        %1113 = vmatprep.subr.mxu0 0.0
        %1114 = vmatpush1.msra.mxu0 0.0
        %1115 = vmatprep.subr.mxu0 0.0
        %1116 = vmatpush1.msra.mxu0 0.0
        %1117 = vmatprep.subr.mxu0 0.0
        %1118 = vmatpush1.msra.mxu0 0.0
        %1119 = vmatprep.subr.mxu0 0.0
        %1120 = vmatpush1.msra.mxu0 0.0
        %1121 = vmatprep.subr.mxu0 0.0
        %1122 = vmatpush1.msra.mxu0 0.0
        %1123 = vmatprep.subr.mxu0 0.0
        %1124 = vmatpush1.msra.mxu0 0.0
        %1125 = vmatprep.subr.mxu0 0.0
        %1126 = vmatpush1.msra.mxu0 0.0
        %1127 = vmatprep.subr.mxu0 0.0
        %1128 = vmatpush1.msra.mxu0 0.0
        %1129 = vmatprep.subr.mxu0 0.0
        %1130 = vmatpush1.msra.mxu0 0.0
        %1131 = vmatprep.subr.mxu0 %v1054
        %1132 = vmatpush1.msra.mxu0 %v1053
        %1133 = vmatprep.subr.mxu0 %v1050
        %1134 = vmatpush1.msra.mxu0 %v1049
        %1135 = vmatprep.subr.mxu0 %v1046
        %1136 = vmatpush1.msra.mxu0 %v1045
        %1137 = vmatprep.subr.mxu0 %v1042
        %1138 = vmatpush1.msra.mxu0 %v1041
        %1139 = vmatprep.subr.mxu0 %v1038
        %1140 = vmatpush1.msra.mxu0 %v1037
        %1141 = vmatprep.subr.mxu0 0.0
        %1142 = vmatpush2.msra.mxu0 0.0
        %1143 = vmatprep.subr.mxu0 0.0
        %1144 = vmatpush2.msra.mxu0 0.0
        %1145 = vmatprep.subr.mxu0 0.0
        %1146 = vmatpush2.msra.mxu0 0.0
        %1147 = vmatprep.subr.mxu0 0.0
        %1148 = vmatpush2.msra.mxu0 0.0
        %1149 = vmatprep.subr.mxu0 0.0
        %1150 = vmatpush2.msra.mxu0 0.0
        %1151 = vmatprep.subr.mxu0 0.0
        %1152 = vmatpush2.msra.mxu0 0.0
        %1153 = vmatprep.subr.mxu0 0.0
        %1154 = vmatpush2.msra.mxu0 0.0
        %1155 = vmatprep.subr.mxu0 0.0
        %1156 = vmatpush2.msra.mxu0 0.0
        %1157 = vmatprep.subr.mxu0 0.0
        %1158 = vmatpush2.msra.mxu0 0.0
        %1159 = vmatprep.subr.mxu0 0.0
        %1160 = vmatpush2.msra.mxu0 0.0
        %1161 = vmatprep.subr.mxu0 0.0
        %1162 = vmatpush2.msra.mxu0 0.0
        %1163 = vmatprep.subr.mxu0 0.0
        %1164 = vmatpush2.msra.mxu0 0.0
        %1165 = vmatprep.subr.mxu0 0.0
        %1166 = vmatpush2.msra.mxu0 0.0
        %1167 = vmatprep.subr.mxu0 0.0
        %1168 = vmatpush2.msra.mxu0 0.0
        %1169 = vmatprep.subr.mxu0 0.0
        %1170 = vmatpush2.msra.mxu0 0.0
        %1171 = vmatprep.subr.mxu0 0.0
        %1172 = vmatpush2.msra.mxu0 0.0
        %1173 = vmatprep.mubr.f32.mxu0 0.0
        %1174 = vmatmul.mubr.f32.gmra.mxu0 %v1095
        %v1175 = vpop.f32.mrf.mxu0
        %v1176 = vadd.f32 %v1072, %v1175
        %v1177 = vpop.f32.mrf.mxu0
        %v1178 = vadd.f32 %v1072, %v1177
        %1179 = vmatprep.mubr.f32.mxu0 0.0
        %1180 = vmatmul.mubr.f32.gmra.mxu0 %v1098
        %v1181 = vpop.f32.mrf.mxu0
        %v1182 = vadd.f32 %v1077, %v1181
        %v1183 = vpop.f32.mrf.mxu0
        %v1184 = vadd.f32 %v1077, %v1183
        %1185 = vmatprep.mubr.f32.mxu0 0.0
        %1186 = vmatmul.mubr.f32.gmra.mxu0 %v1101
        %v1187 = vpop.f32.mrf.mxu0
        %v1188 = vadd.f32 %v1082, %v1187
        %v1189 = vpop.f32.mrf.mxu0
        %v1190 = vadd.f32 %v1082, %v1189
        %1191 = vmatprep.mubr.f32.mxu0 0.0
        %1192 = vmatmul.mubr.f32.gmra.mxu0 %v1104
        %v1193 = vpop.f32.mrf.mxu0
        %v1194 = vadd.f32 %v1087, %v1193
        %v1195 = vpop.f32.mrf.mxu0
        %v1196 = vadd.f32 %v1087, %v1195
        %1197 = vmatprep.mubr.f32.mxu0 0.0
        %1198 = vmatmul.mubr.f32.gmra.mxu0 %v1107
        %v1199 = vpop.f32.mrf.mxu0
        %v1200 = vadd.f32 %v1092, %v1199
        %v1201 = vpop.f32.mrf.mxu0
        %v1202 = vadd.f32 %v1092, %v1201
        %1203 = vdwg.mxu0
        %1204 = vmatprep.subr.mxu0 0.0
        %1205 = vmatpush1.msra.mxu0 0.0
        %1206 = vmatprep.subr.mxu0 0.0
        %1207 = vmatpush1.msra.mxu0 0.0
        %1208 = vmatprep.subr.mxu0 0.0
        %1209 = vmatpush1.msra.mxu0 0.0
        %1210 = vmatprep.subr.mxu0 0.0
        %1211 = vmatpush1.msra.mxu0 0.0
        %1212 = vmatprep.subr.mxu0 0.0
        %1213 = vmatpush1.msra.mxu0 0.0
        %1214 = vmatprep.subr.mxu0 0.0
        %1215 = vmatpush1.msra.mxu0 0.0
        %1216 = vmatprep.subr.mxu0 0.0
        %1217 = vmatpush1.msra.mxu0 0.0
        %1218 = vmatprep.subr.mxu0 0.0
        %1219 = vmatpush1.msra.mxu0 0.0
        %1220 = vmatprep.subr.mxu0 0.0
        %1221 = vmatpush1.msra.mxu0 0.0
        %1222 = vmatprep.subr.mxu0 0.0
        %1223 = vmatpush1.msra.mxu0 0.0
        %1224 = vmatprep.subr.mxu0 0.0
        %1225 = vmatpush1.msra.mxu0 0.0
        %1226 = vmatprep.subr.mxu0 %v1056
        %1227 = vmatpush1.msra.mxu0 %v1055
        %1228 = vmatprep.subr.mxu0 %v1052
        %1229 = vmatpush1.msra.mxu0 %v1051
        %1230 = vmatprep.subr.mxu0 %v1048
        %1231 = vmatpush1.msra.mxu0 %v1047
        %1232 = vmatprep.subr.mxu0 %v1044
        %1233 = vmatpush1.msra.mxu0 %v1043
        %1234 = vmatprep.subr.mxu0 %v1040
        %1235 = vmatpush1.msra.mxu0 %v1039
        %1236 = vmatprep.subr.mxu0 0.0
        %1237 = vmatpush2.msra.mxu0 0.0
        %1238 = vmatprep.subr.mxu0 0.0
        %1239 = vmatpush2.msra.mxu0 0.0
        %1240 = vmatprep.subr.mxu0 0.0
        %1241 = vmatpush2.msra.mxu0 0.0
        %1242 = vmatprep.subr.mxu0 0.0
        %1243 = vmatpush2.msra.mxu0 0.0
        %1244 = vmatprep.subr.mxu0 0.0
        %1245 = vmatpush2.msra.mxu0 0.0
        %1246 = vmatprep.subr.mxu0 0.0
        %1247 = vmatpush2.msra.mxu0 0.0
        %1248 = vmatprep.subr.mxu0 0.0
        %1249 = vmatpush2.msra.mxu0 0.0
        %1250 = vmatprep.subr.mxu0 0.0
        %1251 = vmatpush2.msra.mxu0 0.0
        %1252 = vmatprep.subr.mxu0 0.0
        %1253 = vmatpush2.msra.mxu0 0.0
        %1254 = vmatprep.subr.mxu0 0.0
        %1255 = vmatpush2.msra.mxu0 0.0
        %1256 = vmatprep.subr.mxu0 0.0
        %1257 = vmatpush2.msra.mxu0 0.0
        %1258 = vmatprep.subr.mxu0 0.0
        %1259 = vmatpush2.msra.mxu0 0.0
        %1260 = vmatprep.subr.mxu0 0.0
        %1261 = vmatpush2.msra.mxu0 0.0
        %1262 = vmatprep.subr.mxu0 0.0
        %1263 = vmatpush2.msra.mxu0 0.0
        %1264 = vmatprep.subr.mxu0 0.0
        %1265 = vmatpush2.msra.mxu0 0.0
        %1266 = vmatprep.subr.mxu0 0.0
        %1267 = vmatpush2.msra.mxu0 0.0
        %1268 = vmatprep.mubr.f32.mxu0 0.0
        %1269 = vmatmul.mubr.f32.gmra.mxu0 %v1095
        %v1270 = vpop.f32.mrf.mxu0
        %v1271 = vadd.f32 %v1072, %v1270
        %v1272 = vpop.f32.mrf.mxu0
        %v1273 = vadd.f32 %v1072, %v1272
        %1274 = vmatprep.mubr.f32.mxu0 0.0
        %1275 = vmatmul.mubr.f32.gmra.mxu0 %v1098
        %v1276 = vpop.f32.mrf.mxu0
        %v1277 = vadd.f32 %v1077, %v1276
        %v1278 = vpop.f32.mrf.mxu0
        %v1279 = vadd.f32 %v1077, %v1278
        %1280 = vmatprep.mubr.f32.mxu0 0.0
        %1281 = vmatmul.mubr.f32.gmra.mxu0 %v1101
        %v1282 = vpop.f32.mrf.mxu0
        %v1283 = vadd.f32 %v1082, %v1282
        %v1284 = vpop.f32.mrf.mxu0
        %v1285 = vadd.f32 %v1082, %v1284
        %1286 = vmatprep.mubr.f32.mxu0 0.0
        %1287 = vmatmul.mubr.f32.gmra.mxu0 %v1104
        %v1288 = vpop.f32.mrf.mxu0
        %v1289 = vadd.f32 %v1087, %v1288
        %v1290 = vpop.f32.mrf.mxu0
        %v1291 = vadd.f32 %v1087, %v1290
        %1292 = vmatprep.mubr.f32.mxu0 0.0
        %1293 = vmatmul.mubr.f32.gmra.mxu0 %v1107
        %v1294 = vpop.f32.mrf.mxu0
        %v1295 = vadd.f32 %v1092, %v1294
        %v1296 = vpop.f32.mrf.mxu0
        %v1297 = vadd.f32 %v1092, %v1296
        %1298 = vdwg.mxu0
        %v1299 = vtanh.pop %v1176
        %v1300 = vtanh.pop %v1178
        %v1301 = vtanh.pop %v1271
        %v1302 = vtanh.pop %v1273
        %v1303 = vtanh.pop %v1182
        %v1304 = vtanh.pop %v1184
        %v1305 = vtanh.pop %v1277
        %v1306 = vtanh.pop %v1279
        %v1307 = vtanh.pop %v1188
        %v1308 = vtanh.pop %v1190
        %v1309 = vtanh.pop %v1283
        %v1310 = vtanh.pop %v1285
        %v1311 = vtanh.pop %v1194
        %v1312 = vtanh.pop %v1196
        %v1313 = vtanh.pop %v1289
        %v1314 = vtanh.pop %v1291
        %v1315 = vtanh.pop %v1200
        %v1316 = vtanh.pop %v1202
        %v1317 = vtanh.pop %v1295
        %v1318 = vtanh.pop %v1297
        %s1319 = scalar_lea.vmem %s3, 120
        %v1320 = vld [vmem:[%s1319] sm:$0xff]
        %v1321 = vld [vmem:[%s1319 + $0x8] sm:$0xff]
        %v1322 = vld [vmem:[%s1319 + $0x10] sm:$0xff]
        %v1323 = vld [vmem:[%s1319 + $0x18] sm:$0xff]
        %v1324 = vld [vmem:[%s1319 + $0x20] sm:$0xff]
        %s1325 = scalar_lea.vmem %s4, 120
        %v1326 = vld [vmem:[%s1325] sm:$0xff]
        %v1327 = vld [vmem:[%s1325 + $0x8] sm:$0xff]
        %v1328 = vld [vmem:[%s1325 + $0x10] sm:$0xff]
        %v1329 = vld [vmem:[%s1325 + $0x18] sm:$0xff]
        %v1330 = vld [vmem:[%s1325 + $0x20] sm:$0xff]
        %1332 = vset.pattern.permute.xlu0 0
        %1333 = vperm.xlu0 %1332, %v1326
        %v1334 = vpop.permute.xlu0 %1333
        %1337 = vset.pattern.permute.xlu0 0
        %1338 = vperm.xlu0 %1337, %v1327
        %v1339 = vpop.permute.xlu0 %1338
        %1342 = vset.pattern.permute.xlu0 0
        %1343 = vperm.xlu0 %1342, %v1328
        %v1344 = vpop.permute.xlu0 %1343
        %1347 = vset.pattern.permute.xlu0 0
        %1348 = vperm.xlu0 %1347, %v1329
        %v1349 = vpop.permute.xlu0 %1348
        %1352 = vset.pattern.permute.xlu0 0
        %1353 = vperm.xlu0 %1352, %v1330
        %v1354 = vpop.permute.xlu0 %1353
        %v1357 = vsel %vm569, %v1320, 0
        %v1360 = vsel %vm569, %v1321, 0
        %v1363 = vsel %vm569, %v1322, 0
        %v1366 = vsel %vm569, %v1323, 0
        %v1369 = vsel %vm569, %v1324, 0
        %1371 = vmatprep.subr.mxu0 0.0
        %1372 = vmatpush1.msra.mxu0 0.0
        %1373 = vmatprep.subr.mxu0 0.0
        %1374 = vmatpush1.msra.mxu0 0.0
        %1375 = vmatprep.subr.mxu0 0.0
        %1376 = vmatpush1.msra.mxu0 0.0
        %1377 = vmatprep.subr.mxu0 0.0
        %1378 = vmatpush1.msra.mxu0 0.0
        %1379 = vmatprep.subr.mxu0 0.0
        %1380 = vmatpush1.msra.mxu0 0.0
        %1381 = vmatprep.subr.mxu0 0.0
        %1382 = vmatpush1.msra.mxu0 0.0
        %1383 = vmatprep.subr.mxu0 0.0
        %1384 = vmatpush1.msra.mxu0 0.0
        %1385 = vmatprep.subr.mxu0 0.0
        %1386 = vmatpush1.msra.mxu0 0.0
        %1387 = vmatprep.subr.mxu0 0.0
        %1388 = vmatpush1.msra.mxu0 0.0
        %1389 = vmatprep.subr.mxu0 0.0
        %1390 = vmatpush1.msra.mxu0 0.0
        %1391 = vmatprep.subr.mxu0 0.0
        %1392 = vmatpush1.msra.mxu0 0.0
        %1393 = vmatprep.subr.mxu0 %v1316
        %1394 = vmatpush1.msra.mxu0 %v1315
        %1395 = vmatprep.subr.mxu0 %v1312
        %1396 = vmatpush1.msra.mxu0 %v1311
        %1397 = vmatprep.subr.mxu0 %v1308
        %1398 = vmatpush1.msra.mxu0 %v1307
        %1399 = vmatprep.subr.mxu0 %v1304
        %1400 = vmatpush1.msra.mxu0 %v1303
        %1401 = vmatprep.subr.mxu0 %v1300
        %1402 = vmatpush1.msra.mxu0 %v1299
        %1403 = vmatprep.subr.mxu0 0.0
        %1404 = vmatpush2.msra.mxu0 0.0
        %1405 = vmatprep.subr.mxu0 0.0
        %1406 = vmatpush2.msra.mxu0 0.0
        %1407 = vmatprep.subr.mxu0 0.0
        %1408 = vmatpush2.msra.mxu0 0.0
        %1409 = vmatprep.subr.mxu0 0.0
        %1410 = vmatpush2.msra.mxu0 0.0
        %1411 = vmatprep.subr.mxu0 0.0
        %1412 = vmatpush2.msra.mxu0 0.0
        %1413 = vmatprep.subr.mxu0 0.0
        %1414 = vmatpush2.msra.mxu0 0.0
        %1415 = vmatprep.subr.mxu0 0.0
        %1416 = vmatpush2.msra.mxu0 0.0
        %1417 = vmatprep.subr.mxu0 0.0
        %1418 = vmatpush2.msra.mxu0 0.0
        %1419 = vmatprep.subr.mxu0 0.0
        %1420 = vmatpush2.msra.mxu0 0.0
        %1421 = vmatprep.subr.mxu0 0.0
        %1422 = vmatpush2.msra.mxu0 0.0
        %1423 = vmatprep.subr.mxu0 0.0
        %1424 = vmatpush2.msra.mxu0 0.0
        %1425 = vmatprep.subr.mxu0 0.0
        %1426 = vmatpush2.msra.mxu0 0.0
        %1427 = vmatprep.subr.mxu0 0.0
        %1428 = vmatpush2.msra.mxu0 0.0
        %1429 = vmatprep.subr.mxu0 0.0
        %1430 = vmatpush2.msra.mxu0 0.0
        %1431 = vmatprep.subr.mxu0 0.0
        %1432 = vmatpush2.msra.mxu0 0.0
        %1433 = vmatprep.subr.mxu0 0.0
        %1434 = vmatpush2.msra.mxu0 0.0
        %1435 = vmatprep.mubr.f32.mxu0 0.0
        %1436 = vmatmul.mubr.f32.gmra.mxu0 %v1357
        %v1437 = vpop.f32.mrf.mxu0
        %v1438 = vadd.f32 %v1334, %v1437
        %v1439 = vpop.f32.mrf.mxu0
        %v1440 = vadd.f32 %v1334, %v1439
        %1441 = vmatprep.mubr.f32.mxu0 0.0
        %1442 = vmatmul.mubr.f32.gmra.mxu0 %v1360
        %v1443 = vpop.f32.mrf.mxu0
        %v1444 = vadd.f32 %v1339, %v1443
        %v1445 = vpop.f32.mrf.mxu0
        %v1446 = vadd.f32 %v1339, %v1445
        %1447 = vmatprep.mubr.f32.mxu0 0.0
        %1448 = vmatmul.mubr.f32.gmra.mxu0 %v1363
        %v1449 = vpop.f32.mrf.mxu0
        %v1450 = vadd.f32 %v1344, %v1449
        %v1451 = vpop.f32.mrf.mxu0
        %v1452 = vadd.f32 %v1344, %v1451
        %1453 = vmatprep.mubr.f32.mxu0 0.0
        %1454 = vmatmul.mubr.f32.gmra.mxu0 %v1366
        %v1455 = vpop.f32.mrf.mxu0
        %v1456 = vadd.f32 %v1349, %v1455
        %v1457 = vpop.f32.mrf.mxu0
        %v1458 = vadd.f32 %v1349, %v1457
        %1459 = vmatprep.mubr.f32.mxu0 0.0
        %1460 = vmatmul.mubr.f32.gmra.mxu0 %v1369
        %v1461 = vpop.f32.mrf.mxu0
        %v1462 = vadd.f32 %v1354, %v1461
        %v1463 = vpop.f32.mrf.mxu0
        %v1464 = vadd.f32 %v1354, %v1463
        %1465 = vdwg.mxu0
        %1466 = vmatprep.subr.mxu0 0.0
        %1467 = vmatpush1.msra.mxu0 0.0
        %1468 = vmatprep.subr.mxu0 0.0
        %1469 = vmatpush1.msra.mxu0 0.0
        %1470 = vmatprep.subr.mxu0 0.0
        %1471 = vmatpush1.msra.mxu0 0.0
        %1472 = vmatprep.subr.mxu0 0.0
        %1473 = vmatpush1.msra.mxu0 0.0
        %1474 = vmatprep.subr.mxu0 0.0
        %1475 = vmatpush1.msra.mxu0 0.0
        %1476 = vmatprep.subr.mxu0 0.0
        %1477 = vmatpush1.msra.mxu0 0.0
        %1478 = vmatprep.subr.mxu0 0.0
        %1479 = vmatpush1.msra.mxu0 0.0
        %1480 = vmatprep.subr.mxu0 0.0
        %1481 = vmatpush1.msra.mxu0 0.0
        %1482 = vmatprep.subr.mxu0 0.0
        %1483 = vmatpush1.msra.mxu0 0.0
        %1484 = vmatprep.subr.mxu0 0.0
        %1485 = vmatpush1.msra.mxu0 0.0
        %1486 = vmatprep.subr.mxu0 0.0
        %1487 = vmatpush1.msra.mxu0 0.0
        %1488 = vmatprep.subr.mxu0 %v1318
        %1489 = vmatpush1.msra.mxu0 %v1317
        %1490 = vmatprep.subr.mxu0 %v1314
        %1491 = vmatpush1.msra.mxu0 %v1313
        %1492 = vmatprep.subr.mxu0 %v1310
        %1493 = vmatpush1.msra.mxu0 %v1309
        %1494 = vmatprep.subr.mxu0 %v1306
        %1495 = vmatpush1.msra.mxu0 %v1305
        %1496 = vmatprep.subr.mxu0 %v1302
        %1497 = vmatpush1.msra.mxu0 %v1301
        %1498 = vmatprep.subr.mxu0 0.0
        %1499 = vmatpush2.msra.mxu0 0.0
        %1500 = vmatprep.subr.mxu0 0.0
        %1501 = vmatpush2.msra.mxu0 0.0
        %1502 = vmatprep.subr.mxu0 0.0
        %1503 = vmatpush2.msra.mxu0 0.0
        %1504 = vmatprep.subr.mxu0 0.0
        %1505 = vmatpush2.msra.mxu0 0.0
        %1506 = vmatprep.subr.mxu0 0.0
        %1507 = vmatpush2.msra.mxu0 0.0
        %1508 = vmatprep.subr.mxu0 0.0
        %1509 = vmatpush2.msra.mxu0 0.0
        %1510 = vmatprep.subr.mxu0 0.0
        %1511 = vmatpush2.msra.mxu0 0.0
        %1512 = vmatprep.subr.mxu0 0.0
        %1513 = vmatpush2.msra.mxu0 0.0
        %1514 = vmatprep.subr.mxu0 0.0
        %1515 = vmatpush2.msra.mxu0 0.0
        %1516 = vmatprep.subr.mxu0 0.0
        %1517 = vmatpush2.msra.mxu0 0.0
        %1518 = vmatprep.subr.mxu0 0.0
        %1519 = vmatpush2.msra.mxu0 0.0
        %1520 = vmatprep.subr.mxu0 0.0
        %1521 = vmatpush2.msra.mxu0 0.0
        %1522 = vmatprep.subr.mxu0 0.0
        %1523 = vmatpush2.msra.mxu0 0.0
        %1524 = vmatprep.subr.mxu0 0.0
        %1525 = vmatpush2.msra.mxu0 0.0
        %1526 = vmatprep.subr.mxu0 0.0
        %1527 = vmatpush2.msra.mxu0 0.0
        %1528 = vmatprep.subr.mxu0 0.0
        %1529 = vmatpush2.msra.mxu0 0.0
        %1530 = vmatprep.mubr.f32.mxu0 0.0
        %1531 = vmatmul.mubr.f32.gmra.mxu0 %v1357
        %v1532 = vpop.f32.mrf.mxu0
        %v1533 = vadd.f32 %v1334, %v1532
        %v1534 = vpop.f32.mrf.mxu0
        %v1535 = vadd.f32 %v1334, %v1534
        %1536 = vmatprep.mubr.f32.mxu0 0.0
        %1537 = vmatmul.mubr.f32.gmra.mxu0 %v1360
        %v1538 = vpop.f32.mrf.mxu0
        %v1539 = vadd.f32 %v1339, %v1538
        %v1540 = vpop.f32.mrf.mxu0
        %v1541 = vadd.f32 %v1339, %v1540
        %1542 = vmatprep.mubr.f32.mxu0 0.0
        %1543 = vmatmul.mubr.f32.gmra.mxu0 %v1363
        %v1544 = vpop.f32.mrf.mxu0
        %v1545 = vadd.f32 %v1344, %v1544
        %v1546 = vpop.f32.mrf.mxu0
        %v1547 = vadd.f32 %v1344, %v1546
        %1548 = vmatprep.mubr.f32.mxu0 0.0
        %1549 = vmatmul.mubr.f32.gmra.mxu0 %v1366
        %v1550 = vpop.f32.mrf.mxu0
        %v1551 = vadd.f32 %v1349, %v1550
        %v1552 = vpop.f32.mrf.mxu0
        %v1553 = vadd.f32 %v1349, %v1552
        %1554 = vmatprep.mubr.f32.mxu0 0.0
        %1555 = vmatmul.mubr.f32.gmra.mxu0 %v1369
        %v1556 = vpop.f32.mrf.mxu0
        %v1557 = vadd.f32 %v1354, %v1556
        %v1558 = vpop.f32.mrf.mxu0
        %v1559 = vadd.f32 %v1354, %v1558
        %1560 = vdwg.mxu0
        %v1561 = vtanh.pop %v1438
        %v1562 = vtanh.pop %v1440
        %v1563 = vtanh.pop %v1533
        %v1564 = vtanh.pop %v1535
        %v1565 = vtanh.pop %v1444
        %v1566 = vtanh.pop %v1446
        %v1567 = vtanh.pop %v1539
        %v1568 = vtanh.pop %v1541
        %v1569 = vtanh.pop %v1450
        %v1570 = vtanh.pop %v1452
        %v1571 = vtanh.pop %v1545
        %v1572 = vtanh.pop %v1547
        %v1573 = vtanh.pop %v1456
        %v1574 = vtanh.pop %v1458
        %v1575 = vtanh.pop %v1551
        %v1576 = vtanh.pop %v1553
        %v1577 = vtanh.pop %v1462
        %v1578 = vtanh.pop %v1464
        %v1579 = vtanh.pop %v1557
        %v1580 = vtanh.pop %v1559
        %v1581 = vld [vmem:[%s5] sm:$0x3]
        %v1582 = vld [vmem:[%s6] sm:$0x3]
        %1584 = vset.pattern.permute.xlu0 0
        %1585 = vperm.xlu0 %1584, %v1582
        %v1586 = vpop.permute.xlu0 %1585
        %v1589 = vsel %vm569, %v1581, 0
        %1591 = vmatprep.subr.mxu0 0.0
        %1592 = vmatpush1.msra.mxu0 0.0
        %1593 = vmatprep.subr.mxu0 0.0
        %1594 = vmatpush1.msra.mxu0 0.0
        %1595 = vmatprep.subr.mxu0 0.0
        %1596 = vmatpush1.msra.mxu0 0.0
        %1597 = vmatprep.subr.mxu0 0.0
        %1598 = vmatpush1.msra.mxu0 0.0
        %1599 = vmatprep.subr.mxu0 0.0
        %1600 = vmatpush1.msra.mxu0 0.0
        %1601 = vmatprep.subr.mxu0 0.0
        %1602 = vmatpush1.msra.mxu0 0.0
        %1603 = vmatprep.subr.mxu0 0.0
        %1604 = vmatpush1.msra.mxu0 0.0
        %1605 = vmatprep.subr.mxu0 0.0
        %1606 = vmatpush1.msra.mxu0 0.0
        %1607 = vmatprep.subr.mxu0 0.0
        %1608 = vmatpush1.msra.mxu0 0.0
        %1609 = vmatprep.subr.mxu0 0.0
        %1610 = vmatpush1.msra.mxu0 0.0
        %1611 = vmatprep.subr.mxu0 0.0
        %1612 = vmatpush1.msra.mxu0 0.0
        %1613 = vmatprep.subr.mxu0 %v1578
        %1614 = vmatpush1.msra.mxu0 %v1577
        %1615 = vmatprep.subr.mxu0 %v1574
        %1616 = vmatpush1.msra.mxu0 %v1573
        %1617 = vmatprep.subr.mxu0 %v1570
        %1618 = vmatpush1.msra.mxu0 %v1569
        %1619 = vmatprep.subr.mxu0 %v1566
        %1620 = vmatpush1.msra.mxu0 %v1565
        %1621 = vmatprep.subr.mxu0 %v1562
        %1622 = vmatpush1.msra.mxu0 %v1561
        %1623 = vmatprep.subr.mxu0 0.0
        %1624 = vmatpush2.msra.mxu0 0.0
        %1625 = vmatprep.subr.mxu0 0.0
        %1626 = vmatpush2.msra.mxu0 0.0
        %1627 = vmatprep.subr.mxu0 0.0
        %1628 = vmatpush2.msra.mxu0 0.0
        %1629 = vmatprep.subr.mxu0 0.0
        %1630 = vmatpush2.msra.mxu0 0.0
        %1631 = vmatprep.subr.mxu0 0.0
        %1632 = vmatpush2.msra.mxu0 0.0
        %1633 = vmatprep.subr.mxu0 0.0
        %1634 = vmatpush2.msra.mxu0 0.0
        %1635 = vmatprep.subr.mxu0 0.0
        %1636 = vmatpush2.msra.mxu0 0.0
        %1637 = vmatprep.subr.mxu0 0.0
        %1638 = vmatpush2.msra.mxu0 0.0
        %1639 = vmatprep.subr.mxu0 0.0
        %1640 = vmatpush2.msra.mxu0 0.0
        %1641 = vmatprep.subr.mxu0 0.0
        %1642 = vmatpush2.msra.mxu0 0.0
        %1643 = vmatprep.subr.mxu0 0.0
        %1644 = vmatpush2.msra.mxu0 0.0
        %1645 = vmatprep.subr.mxu0 0.0
        %1646 = vmatpush2.msra.mxu0 0.0
        %1647 = vmatprep.subr.mxu0 0.0
        %1648 = vmatpush2.msra.mxu0 0.0
        %1649 = vmatprep.subr.mxu0 0.0
        %1650 = vmatpush2.msra.mxu0 0.0
        %1651 = vmatprep.subr.mxu0 0.0
        %1652 = vmatpush2.msra.mxu0 0.0
        %1653 = vmatprep.subr.mxu0 0.0
        %1654 = vmatpush2.msra.mxu0 0.0
        %1655 = vmatprep.mubr.f32.mxu0 0.0
        %1656 = vmatmul.mubr.f32.gmra.mxu0 %v1589
        %v1657 = vpop.f32.mrf.mxu0
        %v1658 = vadd.f32 %v1586, %v1657
        %v1659 = vpop.f32.mrf.mxu0
        %v1660 = vadd.f32 %v1586, %v1659
        %1661 = vdwg.mxu0
        %1662 = vmatprep.subr.mxu0 0.0
        %1663 = vmatpush1.msra.mxu0 0.0
        %1664 = vmatprep.subr.mxu0 0.0
        %1665 = vmatpush1.msra.mxu0 0.0
        %1666 = vmatprep.subr.mxu0 0.0
        %1667 = vmatpush1.msra.mxu0 0.0
        %1668 = vmatprep.subr.mxu0 0.0
        %1669 = vmatpush1.msra.mxu0 0.0
        %1670 = vmatprep.subr.mxu0 0.0
        %1671 = vmatpush1.msra.mxu0 0.0
        %1672 = vmatprep.subr.mxu0 0.0
        %1673 = vmatpush1.msra.mxu0 0.0
        %1674 = vmatprep.subr.mxu0 0.0
        %1675 = vmatpush1.msra.mxu0 0.0
        %1676 = vmatprep.subr.mxu0 0.0
        %1677 = vmatpush1.msra.mxu0 0.0
        %1678 = vmatprep.subr.mxu0 0.0
        %1679 = vmatpush1.msra.mxu0 0.0
        %1680 = vmatprep.subr.mxu0 0.0
        %1681 = vmatpush1.msra.mxu0 0.0
        %1682 = vmatprep.subr.mxu0 0.0
        %1683 = vmatpush1.msra.mxu0 0.0
        %1684 = vmatprep.subr.mxu0 %v1580
        %1685 = vmatpush1.msra.mxu0 %v1579
        %1686 = vmatprep.subr.mxu0 %v1576
        %1687 = vmatpush1.msra.mxu0 %v1575
        %1688 = vmatprep.subr.mxu0 %v1572
        %1689 = vmatpush1.msra.mxu0 %v1571
        %1690 = vmatprep.subr.mxu0 %v1568
        %1691 = vmatpush1.msra.mxu0 %v1567
        %1692 = vmatprep.subr.mxu0 %v1564
        %1693 = vmatpush1.msra.mxu0 %v1563
        %1694 = vmatprep.subr.mxu0 0.0
        %1695 = vmatpush2.msra.mxu0 0.0
        %1696 = vmatprep.subr.mxu0 0.0
        %1697 = vmatpush2.msra.mxu0 0.0
        %1698 = vmatprep.subr.mxu0 0.0
        %1699 = vmatpush2.msra.mxu0 0.0
        %1700 = vmatprep.subr.mxu0 0.0
        %1701 = vmatpush2.msra.mxu0 0.0
        %1702 = vmatprep.subr.mxu0 0.0
        %1703 = vmatpush2.msra.mxu0 0.0
        %1704 = vmatprep.subr.mxu0 0.0
        %1705 = vmatpush2.msra.mxu0 0.0
        %1706 = vmatprep.subr.mxu0 0.0
        %1707 = vmatpush2.msra.mxu0 0.0
        %1708 = vmatprep.subr.mxu0 0.0
        %1709 = vmatpush2.msra.mxu0 0.0
        %1710 = vmatprep.subr.mxu0 0.0
        %1711 = vmatpush2.msra.mxu0 0.0
        %1712 = vmatprep.subr.mxu0 0.0
        %1713 = vmatpush2.msra.mxu0 0.0
        %1714 = vmatprep.subr.mxu0 0.0
        %1715 = vmatpush2.msra.mxu0 0.0
        %1716 = vmatprep.subr.mxu0 0.0
        %1717 = vmatpush2.msra.mxu0 0.0
        %1718 = vmatprep.subr.mxu0 0.0
        %1719 = vmatpush2.msra.mxu0 0.0
        %1720 = vmatprep.subr.mxu0 0.0
        %1721 = vmatpush2.msra.mxu0 0.0
        %1722 = vmatprep.subr.mxu0 0.0
        %1723 = vmatpush2.msra.mxu0 0.0
        %1724 = vmatprep.subr.mxu0 0.0
        %1725 = vmatpush2.msra.mxu0 0.0
        %1726 = vmatprep.mubr.f32.mxu0 0.0
        %1727 = vmatmul.mubr.f32.gmra.mxu0 %v1589
        %v1728 = vpop.f32.mrf.mxu0
        %v1729 = vadd.f32 %v1586, %v1728
        %v1730 = vpop.f32.mrf.mxu0
        %v1731 = vadd.f32 %v1586, %v1730
        %1732 = vdwg.mxu0
        %v1737 = vcombine.low %v1658, %v1660
        %v1738 = vcombine.low %v1729, %v1731
        %v1740 = vunpack.c.l.s4 1983009808
        %v1741 = vunpack.c.0.s8 %v1740
        %v1742 = vlaneseq
        %v1743 = vshrl.u32 %v1742, 7
        %v1744 = vsub.s32 %v1741, %v1743
        %v1745 = vrot.slane %v1737, %v1744
        %v1747 = vunpack.c.l.s4 1983009808
        %v1748 = vunpack.c.0.s8 %v1747
        %v1749 = vlaneseq
        %v1750 = vshrl.u32 %v1749, 7
        %v1751 = vsub.s32 %v1748, %v1750
        %v1752 = vrot.slane %v1738, %v1751
        %v1753 = vcombine.low %v1745, %v1752
        %1755 = vst [vmem:[%s272] sm:$0xff] %v1753
        %s1756 = sand.u32 %s181, 1
        %s1757 = scalar_lea.sflag [#allocation3], %s1756
        %s1758 = sand.u32 %s181, 1
        %s1759 = smul.addr %s1758, 8
        %s1760 = scalar_lea.vmem [#allocation2], %s1759
        // Predicated region
        $region49: #{tpu_custom_call.1} parent=47 // pred_check
          %p1761 = pneg %p191
        $region50: #{tpu_custom_call.1} parent=47 // pred_check_branch
          %1763 = sbr.rel (%p1761) target = $region52
        $region51: #{tpu_custom_call.1} parent=47 // pred_region
          %s1764 = smul.u32 4, %s21
          %s1766 = ssub.s32 128, 128
          %1767 = vsyncadd %s1757, %s1766
          %s1768 = smul.addr %s1764, 32
          %s1769 = scalar_lea.hbm %s7, %s1768
          %s1771 = sshll.u32 %s1760, 4
          %s1772 = int_to_ptr.vmem [resolvable:$true] %s1771
          %1774 = dma.vmem_to_hbm [thread:$0]  %s1772, 128, %s1769, %s1757
        $region52: #{tpu_custom_call.1} parent=47 // pred_fallthru
          _
      $region48: #{tpu_custom_call.1} parent=5 // pred_fallthru
        _
      %p1775 = scmp.le.s32.totalorder 2, %s16
      // Predicated region
      $region53: #{tpu_custom_call.1} parent=5 // pred_check
        %p1776 = pneg %p1775
      $region54: #{tpu_custom_call.1} parent=5 // pred_check_branch
        %1778 = sbr.rel (%p1776) target = $region56
      $region55: #{tpu_custom_call.1} parent=5 // pred_region
        %s1779 = ssub.s32 %s16, 2
        // Predicated region
        $region57: #{tpu_custom_call.1} parent=55 // pred_check
          %p1780 = pneg %p197
        $region58: #{tpu_custom_call.1} parent=55 // pred_check_branch
          %1782 = sbr.rel (%p1780) target = $region60
        $region59: #{tpu_custom_call.1} parent=55 // pred_region
          %s1783 = sand.u32 %s182, 1
          %s1784 = scalar_lea.sflag [#allocation3], %s1783
          %s1785 = sand.u32 %s182, 1
          %s1786 = smul.addr %s1785, 8
          %s1787 = scalar_lea.vmem [#allocation2], %s1786
          %1788 = dma.done %s1784, 128
        $region60: #{tpu_custom_call.1} parent=55 // pred_fallthru
          _
      $region56: #{tpu_custom_call.1} parent=5 // pred_fallthru
        _
    $region6: #{tpu_custom_call.1} parent=1 // loop_footer
      %s20 = sadd.s32 1, %s16
    $region7: #{tpu_custom_call.1} parent=1 // loop_footer_branch
      %15 = sbr.rel target = $region3
    $region8: #{tpu_custom_call.1} parent=1 // loop_exit
      _
    %1789 = vsyncpa [#allocation3], 1
    %s1790 = scalar_lea.sflag [#allocation3], 1
    %1791 = vsyncpa %s1790, 1

</llo_original>
